<compile_context>
chip_gen: v5e
topology: v5e:2x2
jax: 0.10.0
libtpu: 0.0.40
codegen_flags: <defaults>
</compile_context>

<pallas_src>
import functools
import math

import jax
import jax.numpy as jnp
from jax.experimental import pallas as pl
from jax.experimental.pallas import tpu as pltpu


# --------------------------- LSTM cell gate math ---------------------------
def _lstm_cell_update(pre, c, H):
    """pre: (B_pad, 4H) fused pre-activations in PyTorch (i, f, g, o) order."""
    # Two full-width EUP pushes over the fused pre-activation instead of four
    # narrow per-gate ones; gate selection is a static lane slice.
    sig = jax.nn.sigmoid(pre)
    tnh = jnp.tanh(pre)
    i_g = sig[:, 0 * H:1 * H]
    f_g = sig[:, 1 * H:2 * H]
    g_g = tnh[:, 2 * H:3 * H]
    o_g = sig[:, 3 * H:4 * H]
    c_new = f_g * c + i_g * g_g
    h_new = o_g * jnp.tanh(c_new)
    return h_new, c_new


# --------------------------- Fused forward kernel ---------------------------
def _fused_forward_kernel(*refs, T, B_pad, n_lstm, n_dense, activation):
    """Entire LSTMPredictor forward in one kernel.

    Positional refs layout:
      x_ref : (T*B_pad, F)           time-major, batch padded to sublane width
      per LSTM layer i:
        wih : (D_i, 4*H_i)           input -> gates (i, f, g, o order)
        whh : (H_i, 4*H_i)           FUSED recurrent gate weights
        b   : (1, 4*H_i)             b_ih + b_hh
      per dense layer j (output head is the last one):
        w   : (D_in_j, D_out_j)
        b   : (1, D_out_j)
      out_ref : (B_pad, output_size)
    """
    pos = 0
    x_ref = refs[pos]
    pos += 1
    lstm_refs = []
    for _ in range(n_lstm):
        lstm_refs.append((refs[pos], refs[pos + 1], refs[pos + 2]))
        pos += 3
    dense_refs = []
    for _ in range(n_dense):
        dense_refs.append((refs[pos], refs[pos + 1]))
        pos += 2
    out_ref = refs[pos]

    # Load weights into values once (VMEM-resident across the recurrence).
    wih = [r[0][...] for r in lstm_refs]
    whh = [r[1][...] for r in lstm_refs]
    bias = [r[2][...] for r in lstm_refs]
    Hs = [w.shape[0] for w in whh]

    # Layer 0: hoisted input projection -- one big lane-dense MXU matmul shared
    # by all timesteps, combined bias folded in. Off the serial critical path.
    xg0 = jnp.dot(x_ref[...], wih[0],
                  preferred_element_type=jnp.float32) + bias[0]

    h = [jnp.zeros((B_pad, Hk), jnp.float32) for Hk in Hs]
    c = [jnp.zeros((B_pad, Hk), jnp.float32) for Hk in Hs]

    # Fully unrolled time loop (T static & small). Layer li step t is emitted
    # immediately after layer li-1 step t, so layer li-1 step t+1 and layer li
    # step t are independent chains the scheduler can overlap (wavefront).
    for t in range(T):
        rs = t * B_pad  # multiple of 8 -> sublane-aligned static slice
        # ---- Layer 0 ----
        pre = xg0[rs:rs + B_pad]
        if t > 0:  # h == 0 at t=0: skip the recurrent matmul entirely
            pre = pre + jnp.dot(h[0], whh[0], preferred_element_type=jnp.float32)
        h[0], c[0] = _lstm_cell_update(pre, c[0], Hs[0])
        # ---- Layers >= 1: per-step input + recurrent projections ----
        for li in range(1, n_lstm):
            pre = jnp.dot(h[li - 1], wih[li],
                          preferred_element_type=jnp.float32) + bias[li]
            if t > 0:
                pre = pre + jnp.dot(h[li], whh[li],
                                    preferred_element_type=jnp.float32)
            h[li], c[li] = _lstm_cell_update(pre, c[li], Hs[li])

    # Dense stack + output head on vreg-resident (B_pad, .) tiles.
    y = h[n_lstm - 1]
    for di, (w_ref, b_ref) in enumerate(dense_refs):
        y = jnp.dot(y, w_ref[...], preferred_element_type=jnp.float32) + b_ref[...]
        if di + 1 < n_dense:  # activation on hidden dense layers only
            y = jax.nn.sigmoid(y) if activation == "sigmoid" else jnp.maximum(y, 0.0)
    out_ref[...] = y.astype(out_ref.dtype)


# --------------------------- Parameter packing ---------------------------
def pack_params(params):
    """One-time conversion from PyTorch layout to kernel layout."""
    packed = {"lstm": [], "dense": []}
    for layer in params["lstm"]:
        w_ih = layer["w_ih"]                       # (4H, D)
        w_hh = layer["w_hh"]                       # (4H, H)
        H = w_hh.shape[1]
        packed["lstm"].append(dict(
            wih=jnp.transpose(w_ih),               # (D, 4H): x @ wih == x @ W_ih.T
            whh=jnp.transpose(w_hh),               # (H, 4H): fused gate weights
            b=(layer["b_ih"] + layer["b_hh"]).reshape(1, 4 * H)))
    for layer in params["dense"]:
        packed["dense"].append(dict(w=jnp.transpose(layer["w"]),
                                    b=layer["b"].reshape(1, -1)))
    packed["dense"].append(dict(w=jnp.transpose(params["out"]["w"]),
                                b=params["out"]["b"].reshape(1, -1)))
    return packed


# --------------------------- Forward pass (Pallas) ---------------------------
def lstm_predictor_forward(packed, x, activation="relu"):
    """x: (B, T, input_size) batch-first float32, like the PyTorch forward."""
    B, T, F = x.shape
    n_lstm = len(packed["lstm"])
    n_dense = len(packed["dense"])
    out_dim = packed["dense"][-1]["w"].shape[1]

    # Pad batch to the sublane width so all per-step tiles are (8k, .) aligned.
    B_pad = ((B + 7) // 8) * 8
    x_tm = jnp.transpose(x, (1, 0, 2))             # (T, B, F) time-major
    if B_pad != B:
        x_tm = jnp.pad(x_tm, ((0, 0), (0, B_pad - B), (0, 0)))
    x2d = x_tm.reshape(T * B_pad, F)

    args = [x2d]
    for p in packed["lstm"]:
        args += [p["wih"], p["whh"], p["b"]]
    for p in packed["dense"]:
        args += [p["w"], p["b"]]

    kernel = functools.partial(
        _fused_forward_kernel,
        T=T, B_pad=B_pad, n_lstm=n_lstm, n_dense=n_dense, activation=activation)

    vmem_spec = pl.BlockSpec(memory_space=pltpu.MemorySpace.VMEM)
    out_padded = pl.pallas_call(
        kernel,
        out_shape=jax.ShapeDtypeStruct((B_pad, out_dim), jnp.float32),
        in_specs=[vmem_spec] * len(args),
        out_specs=vmem_spec,
        compiler_params=pltpu.CompilerParams(
            vmem_limit_bytes=32 * 1024 * 1024),    # explicit & safe on v5e/v6e/v7x
    )(*args)
    return out_padded[:B]                           # drop padded batch rows


# ------------------- Parameter init (PyTorch layout) -------------------
def init_lstm_predictor_params(key, input_size, lstm_neurons, dense_neurons, output_size):
    params = {"lstm": [], "dense": [], "out": None}
    for i, hsz in enumerate(lstm_neurons):
        d = input_size if i == 0 else lstm_neurons[i - 1]
        k = 1.0 / math.sqrt(hsz)
        key, k1, k2, k3, k4 = jax.random.split(key, 5)
        params["lstm"].append(dict(
            w_ih=jax.random.uniform(k1, (4 * hsz, d), jnp.float32, -k, k),
            w_hh=jax.random.uniform(k2, (4 * hsz, hsz), jnp.float32, -k, k),
            b_ih=jax.random.uniform(k3, (4 * hsz,), jnp.float32, -k, k),
            b_hh=jax.random.uniform(k4, (4 * hsz,), jnp.float32, -k, k),
        ))
    for i, n in enumerate(dense_neurons):
        d = lstm_neurons[-1] if i == 0 else dense_neurons[i - 1]
        k = 1.0 / math.sqrt(d)
        key, k1, k2 = jax.random.split(key, 3)
        params["dense"].append(dict(
            w=jax.random.uniform(k1, (n, d), jnp.float32, -k, k),
            b=jax.random.uniform(k2, (n,), jnp.float32, -k, k),
        ))
    d = dense_neurons[-1]
    k = 1.0 / math.sqrt(d)
    key, k1, k2 = jax.random.split(key, 3)
    params["out"] = dict(
        w=jax.random.uniform(k1, (output_size, d), jnp.float32, -k, k),
        b=jax.random.uniform(k2, (output_size,), jnp.float32, -k, k),
    )
    return params


# --------------------------- Pure-JAX reference ---------------------------
def _reference_forward(params, x, activation="relu"):
    def lstm_ref(seq, p):
        T, B, _ = seq.shape
        H = p["w_hh"].shape[1]
        h = jnp.zeros((B, H), jnp.float32)
        c = jnp.zeros((B, H), jnp.float32)
        outs = []
        for t in range(T):
            g = seq[t] @ p["w_ih"].T + p["b_ih"] + h @ p["w_hh"].T + p["b_hh"]
            i, f, gg, o = jnp.split(g, 4, axis=1)
            c = jax.nn.sigmoid(f) * c + jax.nn.sigmoid(i) * jnp.tanh(gg)
            h = jax.nn.sigmoid(o) * jnp.tanh(c)
            outs.append(h)
        return jnp.stack(outs, axis=0)

    act = jax.nn.sigmoid if activation == "sigmoid" else (lambda v: jnp.maximum(v, 0.0))
    seq = jnp.transpose(x, (1, 0, 2))
    for p in params["lstm"]:
        seq = lstm_ref(seq, p)
    y = seq[-1]
    for p in params["dense"]:
        y = act(y @ p["w"].T + p["b"])
    return y @ params["out"]["w"].T + params["out"]["b"]


if __name__ == "__main__":
    # Small shapes consistent with the module's forward.
    B, T = 2, 8
    input_size = 16
    lstm_neurons = [32, 32]
    dense_neurons = [16]
    output_size = 1
    activation = "relu"

    key = jax.random.PRNGKey(0)
    key, xkey, pkey = jax.random.split(key, 3)
    x = jax.random.normal(xkey, (B, T, input_size), jnp.float32)
    params = init_lstm_predictor_params(pkey, input_size, lstm_neurons,
                                        dense_neurons, output_size)

    # Pre-pack weights ONCE (transposes / fused-gate layout / combined bias).
    packed = pack_params(params)

    fwd = jax.jit(lambda p, xx: lstm_predictor_forward(p, xx, activation=activation))
    out = jax.block_until_ready(fwd(packed, x))

    ref = _reference_forward(params, x, activation=activation)
    assert out.shape == (B, output_size)
    assert jnp.allclose(out, ref, atol=1e-4, rtol=1e-4), "mismatch vs. pure-JAX reference"

    print("KERNEL_OK")
</pallas_src>

<mosaic_0001>
module attributes {stable_mosaic.version = 11 : i64} {
  func.func @_fused_forward_kernel(%arg0: memref<64x16xf32, #tpu.memory_space<vmem>>, %arg1: memref<16x128xf32, #tpu.memory_space<vmem>>, %arg2: memref<32x128xf32, #tpu.memory_space<vmem>>, %arg3: memref<1x128xf32, #tpu.memory_space<vmem>>, %arg4: memref<32x128xf32, #tpu.memory_space<vmem>>, %arg5: memref<32x128xf32, #tpu.memory_space<vmem>>, %arg6: memref<1x128xf32, #tpu.memory_space<vmem>>, %arg7: memref<32x16xf32, #tpu.memory_space<vmem>>, %arg8: memref<1x16xf32, #tpu.memory_space<vmem>>, %arg9: memref<16x1xf32, #tpu.memory_space<vmem>>, %arg10: memref<1x1xf32, #tpu.memory_space<vmem>>, %arg11: memref<8x1xf32, #tpu.memory_space<vmem>>) attributes {dimension_semantics = [], scalar_prefetch = 0 : i64, scratch_operands = 0 : i64, tpu.core_type = #tpu.core_type<tc>} {
    %c0 = arith.constant 0 : index
    %c0_0 = arith.constant 0 : index
    %0 = vector.load %arg1[%c0, %c0_0] : memref<16x128xf32, #tpu.memory_space<vmem>>, vector<16x128xf32>
    %c0_1 = arith.constant 0 : index
    %c0_2 = arith.constant 0 : index
    %1 = vector.load %arg4[%c0_1, %c0_2] : memref<32x128xf32, #tpu.memory_space<vmem>>, vector<32x128xf32>
    %c0_3 = arith.constant 0 : index
    %c0_4 = arith.constant 0 : index
    %2 = vector.load %arg2[%c0_3, %c0_4] : memref<32x128xf32, #tpu.memory_space<vmem>>, vector<32x128xf32>
    %c0_5 = arith.constant 0 : index
    %c0_6 = arith.constant 0 : index
    %3 = vector.load %arg5[%c0_5, %c0_6] : memref<32x128xf32, #tpu.memory_space<vmem>>, vector<32x128xf32>
    %c0_7 = arith.constant 0 : index
    %c0_8 = arith.constant 0 : index
    %4 = vector.load %arg3[%c0_7, %c0_8] : memref<1x128xf32, #tpu.memory_space<vmem>>, vector<1x128xf32>
    %c0_9 = arith.constant 0 : index
    %c0_10 = arith.constant 0 : index
    %5 = vector.load %arg6[%c0_9, %c0_10] : memref<1x128xf32, #tpu.memory_space<vmem>>, vector<1x128xf32>
    %c0_11 = arith.constant 0 : index
    %c0_12 = arith.constant 0 : index
    %6 = vector.load %arg0[%c0_11, %c0_12] : memref<64x16xf32, #tpu.memory_space<vmem>>, vector<64x16xf32>
    %cst = arith.constant dense<0.000000e+00> : vector<64x128xf32>
    %7 = tpu.matmul %6, %0, %cst {dimension_numbers = #tpu.dot_dimension_numbers<[1], [0], [0], [1], [0, 0, 1, 1], [], []>} : vector<64x16xf32>, vector<16x128xf32>, vector<64x128xf32> -> vector<64x128xf32>
    %8 = vector.broadcast %4 : vector<1x128xf32> to vector<64x128xf32>
    %9 = arith.addf %7, %8 : vector<64x128xf32>
    %cst_13 = arith.constant 0.000000e+00 : f32
    %10 = vector.broadcast %cst_13 : f32 to vector<8x32xf32>
    %cst_14 = arith.constant 0.000000e+00 : f32
    %11 = vector.broadcast %cst_14 : f32 to vector<8x32xf32>
    %12 = vector.extract_strided_slice %9 {offsets = [0, 0], sizes = [8, 128], strides = [1, 1]} : vector<64x128xf32> to vector<8x128xf32>
    %13 = arith.negf %12 : vector<8x128xf32>
    %14 = math.exp %13 : vector<8x128xf32>
    %cst_15 = arith.constant 1.000000e+00 : f32
    %15 = vector.broadcast %cst_15 : f32 to vector<8x128xf32>
    %16 = arith.addf %15, %14 : vector<8x128xf32>
    %17 = arith.divf %15, %16 : vector<8x128xf32>
    %18 = math.tanh %12 : vector<8x128xf32>
    %19 = vector.extract_strided_slice %17 {offsets = [0, 0], sizes = [8, 32], strides = [1, 1]} : vector<8x128xf32> to vector<8x32xf32>
    %20 = vector.extract_strided_slice %17 {offsets = [0, 32], sizes = [8, 32], strides = [1, 1]} : vector<8x128xf32> to vector<8x32xf32>
    %21 = vector.extract_strided_slice %18 {offsets = [0, 64], sizes = [8, 32], strides = [1, 1]} : vector<8x128xf32> to vector<8x32xf32>
    %22 = vector.extract_strided_slice %17 {offsets = [0, 96], sizes = [8, 32], strides = [1, 1]} : vector<8x128xf32> to vector<8x32xf32>
    %23 = arith.mulf %20, %10 : vector<8x32xf32>
    %24 = arith.mulf %19, %21 : vector<8x32xf32>
    %25 = arith.addf %23, %24 : vector<8x32xf32>
    %26 = math.tanh %25 : vector<8x32xf32>
    %27 = arith.mulf %22, %26 : vector<8x32xf32>
    %cst_16 = arith.constant dense<0.000000e+00> : vector<8x128xf32>
    %28 = tpu.matmul %27, %1, %cst_16 {dimension_numbers = #tpu.dot_dimension_numbers<[1], [0], [0], [1], [0, 0, 1, 1], [], []>} : vector<8x32xf32>, vector<32x128xf32>, vector<8x128xf32> -> vector<8x128xf32>
    %29 = vector.broadcast %5 : vector<1x128xf32> to vector<8x128xf32>
    %30 = arith.addf %28, %29 : vector<8x128xf32>
    %31 = arith.negf %30 : vector<8x128xf32>
    %32 = math.exp %31 : vector<8x128xf32>
    %cst_17 = arith.constant 1.000000e+00 : f32
    %33 = vector.broadcast %cst_17 : f32 to vector<8x128xf32>
    %34 = arith.addf %33, %32 : vector<8x128xf32>
    %35 = arith.divf %33, %34 : vector<8x128xf32>
    %36 = math.tanh %30 : vector<8x128xf32>
    %37 = vector.extract_strided_slice %35 {offsets = [0, 0], sizes = [8, 32], strides = [1, 1]} : vector<8x128xf32> to vector<8x32xf32>
    %38 = vector.extract_strided_slice %35 {offsets = [0, 32], sizes = [8, 32], strides = [1, 1]} : vector<8x128xf32> to vector<8x32xf32>
    %39 = vector.extract_strided_slice %36 {offsets = [0, 64], sizes = [8, 32], strides = [1, 1]} : vector<8x128xf32> to vector<8x32xf32>
    %40 = vector.extract_strided_slice %35 {offsets = [0, 96], sizes = [8, 32], strides = [1, 1]} : vector<8x128xf32> to vector<8x32xf32>
    %41 = arith.mulf %38, %11 : vector<8x32xf32>
    %42 = arith.mulf %37, %39 : vector<8x32xf32>
    %43 = arith.addf %41, %42 : vector<8x32xf32>
    %44 = math.tanh %43 : vector<8x32xf32>
    %45 = arith.mulf %40, %44 : vector<8x32xf32>
    %46 = vector.extract_strided_slice %9 {offsets = [8, 0], sizes = [8, 128], strides = [1, 1]} : vector<64x128xf32> to vector<8x128xf32>
    %cst_18 = arith.constant dense<0.000000e+00> : vector<8x128xf32>
    %47 = tpu.matmul %27, %2, %cst_18 {dimension_numbers = #tpu.dot_dimension_numbers<[1], [0], [0], [1], [0, 0, 1, 1], [], []>} : vector<8x32xf32>, vector<32x128xf32>, vector<8x128xf32> -> vector<8x128xf32>
    %48 = arith.addf %46, %47 : vector<8x128xf32>
    %49 = arith.negf %48 : vector<8x128xf32>
    %50 = math.exp %49 : vector<8x128xf32>
    %cst_19 = arith.constant 1.000000e+00 : f32
    %51 = vector.broadcast %cst_19 : f32 to vector<8x128xf32>
    %52 = arith.addf %51, %50 : vector<8x128xf32>
    %53 = arith.divf %51, %52 : vector<8x128xf32>
    %54 = math.tanh %48 : vector<8x128xf32>
    %55 = vector.extract_strided_slice %53 {offsets = [0, 0], sizes = [8, 32], strides = [1, 1]} : vector<8x128xf32> to vector<8x32xf32>
    %56 = vector.extract_strided_slice %53 {offsets = [0, 32], sizes = [8, 32], strides = [1, 1]} : vector<8x128xf32> to vector<8x32xf32>
    %57 = vector.extract_strided_slice %54 {offsets = [0, 64], sizes = [8, 32], strides = [1, 1]} : vector<8x128xf32> to vector<8x32xf32>
    %58 = vector.extract_strided_slice %53 {offsets = [0, 96], sizes = [8, 32], strides = [1, 1]} : vector<8x128xf32> to vector<8x32xf32>
    %59 = arith.mulf %56, %25 : vector<8x32xf32>
    %60 = arith.mulf %55, %57 : vector<8x32xf32>
    %61 = arith.addf %59, %60 : vector<8x32xf32>
    %62 = math.tanh %61 : vector<8x32xf32>
    %63 = arith.mulf %58, %62 : vector<8x32xf32>
    %cst_20 = arith.constant dense<0.000000e+00> : vector<8x128xf32>
    %64 = tpu.matmul %63, %1, %cst_20 {dimension_numbers = #tpu.dot_dimension_numbers<[1], [0], [0], [1], [0, 0, 1, 1], [], []>} : vector<8x32xf32>, vector<32x128xf32>, vector<8x128xf32> -> vector<8x128xf32>
    %65 = vector.broadcast %5 : vector<1x128xf32> to vector<8x128xf32>
    %66 = arith.addf %64, %65 : vector<8x128xf32>
    %cst_21 = arith.constant dense<0.000000e+00> : vector<8x128xf32>
    %67 = tpu.matmul %45, %3, %cst_21 {dimension_numbers = #tpu.dot_dimension_numbers<[1], [0], [0], [1], [0, 0, 1, 1], [], []>} : vector<8x32xf32>, vector<32x128xf32>, vector<8x128xf32> -> vector<8x128xf32>
    %68 = arith.addf %66, %67 : vector<8x128xf32>
    %69 = arith.negf %68 : vector<8x128xf32>
    %70 = math.exp %69 : vector<8x128xf32>
    %cst_22 = arith.constant 1.000000e+00 : f32
    %71 = vector.broadcast %cst_22 : f32 to vector<8x128xf32>
    %72 = arith.addf %71, %70 : vector<8x128xf32>
    %73 = arith.divf %71, %72 : vector<8x128xf32>
    %74 = math.tanh %68 : vector<8x128xf32>
    %75 = vector.extract_strided_slice %73 {offsets = [0, 0], sizes = [8, 32], strides = [1, 1]} : vector<8x128xf32> to vector<8x32xf32>
    %76 = vector.extract_strided_slice %73 {offsets = [0, 32], sizes = [8, 32], strides = [1, 1]} : vector<8x128xf32> to vector<8x32xf32>
    %77 = vector.extract_strided_slice %74 {offsets = [0, 64], sizes = [8, 32], strides = [1, 1]} : vector<8x128xf32> to vector<8x32xf32>
    %78 = vector.extract_strided_slice %73 {offsets = [0, 96], sizes = [8, 32], strides = [1, 1]} : vector<8x128xf32> to vector<8x32xf32>
    %79 = arith.mulf %76, %43 : vector<8x32xf32>
    %80 = arith.mulf %75, %77 : vector<8x32xf32>
    %81 = arith.addf %79, %80 : vector<8x32xf32>
    %82 = math.tanh %81 : vector<8x32xf32>
    %83 = arith.mulf %78, %82 : vector<8x32xf32>
    %84 = vector.extract_strided_slice %9 {offsets = [16, 0], sizes = [8, 128], strides = [1, 1]} : vector<64x128xf32> to vector<8x128xf32>
    %cst_23 = arith.constant dense<0.000000e+00> : vector<8x128xf32>
    %85 = tpu.matmul %63, %2, %cst_23 {dimension_numbers = #tpu.dot_dimension_numbers<[1], [0], [0], [1], [0, 0, 1, 1], [], []>} : vector<8x32xf32>, vector<32x128xf32>, vector<8x128xf32> -> vector<8x128xf32>
    %86 = arith.addf %84, %85 : vector<8x128xf32>
    %87 = arith.negf %86 : vector<8x128xf32>
    %88 = math.exp %87 : vector<8x128xf32>
    %cst_24 = arith.constant 1.000000e+00 : f32
    %89 = vector.broadcast %cst_24 : f32 to vector<8x128xf32>
    %90 = arith.addf %89, %88 : vector<8x128xf32>
    %91 = arith.divf %89, %90 : vector<8x128xf32>
    %92 = math.tanh %86 : vector<8x128xf32>
    %93 = vector.extract_strided_slice %91 {offsets = [0, 0], sizes = [8, 32], strides = [1, 1]} : vector<8x128xf32> to vector<8x32xf32>
    %94 = vector.extract_strided_slice %91 {offsets = [0, 32], sizes = [8, 32], strides = [1, 1]} : vector<8x128xf32> to vector<8x32xf32>
    %95 = vector.extract_strided_slice %92 {offsets = [0, 64], sizes = [8, 32], strides = [1, 1]} : vector<8x128xf32> to vector<8x32xf32>
    %96 = vector.extract_strided_slice %91 {offsets = [0, 96], sizes = [8, 32], strides = [1, 1]} : vector<8x128xf32> to vector<8x32xf32>
    %97 = arith.mulf %94, %61 : vector<8x32xf32>
    %98 = arith.mulf %93, %95 : vector<8x32xf32>
    %99 = arith.addf %97, %98 : vector<8x32xf32>
    %100 = math.tanh %99 : vector<8x32xf32>
    %101 = arith.mulf %96, %100 : vector<8x32xf32>
    %cst_25 = arith.constant dense<0.000000e+00> : vector<8x128xf32>
    %102 = tpu.matmul %101, %1, %cst_25 {dimension_numbers = #tpu.dot_dimension_numbers<[1], [0], [0], [1], [0, 0, 1, 1], [], []>} : vector<8x32xf32>, vector<32x128xf32>, vector<8x128xf32> -> vector<8x128xf32>
    %103 = vector.broadcast %5 : vector<1x128xf32> to vector<8x128xf32>
    %104 = arith.addf %102, %103 : vector<8x128xf32>
    %cst_26 = arith.constant dense<0.000000e+00> : vector<8x128xf32>
    %105 = tpu.matmul %83, %3, %cst_26 {dimension_numbers = #tpu.dot_dimension_numbers<[1], [0], [0], [1], [0, 0, 1, 1], [], []>} : vector<8x32xf32>, vector<32x128xf32>, vector<8x128xf32> -> vector<8x128xf32>
    %106 = arith.addf %104, %105 : vector<8x128xf32>
    %107 = arith.negf %106 : vector<8x128xf32>
    %108 = math.exp %107 : vector<8x128xf32>
    %cst_27 = arith.constant 1.000000e+00 : f32
    %109 = vector.broadcast %cst_27 : f32 to vector<8x128xf32>
    %110 = arith.addf %109, %108 : vector<8x128xf32>
    %111 = arith.divf %109, %110 : vector<8x128xf32>
    %112 = math.tanh %106 : vector<8x128xf32>
    %113 = vector.extract_strided_slice %111 {offsets = [0, 0], sizes = [8, 32], strides = [1, 1]} : vector<8x128xf32> to vector<8x32xf32>
    %114 = vector.extract_strided_slice %111 {offsets = [0, 32], sizes = [8, 32], strides = [1, 1]} : vector<8x128xf32> to vector<8x32xf32>
    %115 = vector.extract_strided_slice %112 {offsets = [0, 64], sizes = [8, 32], strides = [1, 1]} : vector<8x128xf32> to vector<8x32xf32>
    %116 = vector.extract_strided_slice %111 {offsets = [0, 96], sizes = [8, 32], strides = [1, 1]} : vector<8x128xf32> to vector<8x32xf32>
    %117 = arith.mulf %114, %81 : vector<8x32xf32>
    %118 = arith.mulf %113, %115 : vector<8x32xf32>
    %119 = arith.addf %117, %118 : vector<8x32xf32>
    %120 = math.tanh %119 : vector<8x32xf32>
    %121 = arith.mulf %116, %120 : vector<8x32xf32>
    %122 = vector.extract_strided_slice %9 {offsets = [24, 0], sizes = [8, 128], strides = [1, 1]} : vector<64x128xf32> to vector<8x128xf32>
    %cst_28 = arith.constant dense<0.000000e+00> : vector<8x128xf32>
    %123 = tpu.matmul %101, %2, %cst_28 {dimension_numbers = #tpu.dot_dimension_numbers<[1], [0], [0], [1], [0, 0, 1, 1], [], []>} : vector<8x32xf32>, vector<32x128xf32>, vector<8x128xf32> -> vector<8x128xf32>
    %124 = arith.addf %122, %123 : vector<8x128xf32>
    %125 = arith.negf %124 : vector<8x128xf32>
    %126 = math.exp %125 : vector<8x128xf32>
    %cst_29 = arith.constant 1.000000e+00 : f32
    %127 = vector.broadcast %cst_29 : f32 to vector<8x128xf32>
    %128 = arith.addf %127, %126 : vector<8x128xf32>
    %129 = arith.divf %127, %128 : vector<8x128xf32>
    %130 = math.tanh %124 : vector<8x128xf32>
    %131 = vector.extract_strided_slice %129 {offsets = [0, 0], sizes = [8, 32], strides = [1, 1]} : vector<8x128xf32> to vector<8x32xf32>
    %132 = vector.extract_strided_slice %129 {offsets = [0, 32], sizes = [8, 32], strides = [1, 1]} : vector<8x128xf32> to vector<8x32xf32>
    %133 = vector.extract_strided_slice %130 {offsets = [0, 64], sizes = [8, 32], strides = [1, 1]} : vector<8x128xf32> to vector<8x32xf32>
    %134 = vector.extract_strided_slice %129 {offsets = [0, 96], sizes = [8, 32], strides = [1, 1]} : vector<8x128xf32> to vector<8x32xf32>
    %135 = arith.mulf %132, %99 : vector<8x32xf32>
    %136 = arith.mulf %131, %133 : vector<8x32xf32>
    %137 = arith.addf %135, %136 : vector<8x32xf32>
    %138 = math.tanh %137 : vector<8x32xf32>
    %139 = arith.mulf %134, %138 : vector<8x32xf32>
    %cst_30 = arith.constant dense<0.000000e+00> : vector<8x128xf32>
    %140 = tpu.matmul %139, %1, %cst_30 {dimension_numbers = #tpu.dot_dimension_numbers<[1], [0], [0], [1], [0, 0, 1, 1], [], []>} : vector<8x32xf32>, vector<32x128xf32>, vector<8x128xf32> -> vector<8x128xf32>
    %141 = vector.broadcast %5 : vector<1x128xf32> to vector<8x128xf32>
    %142 = arith.addf %140, %141 : vector<8x128xf32>
    %cst_31 = arith.constant dense<0.000000e+00> : vector<8x128xf32>
    %143 = tpu.matmul %121, %3, %cst_31 {dimension_numbers = #tpu.dot_dimension_numbers<[1], [0], [0], [1], [0, 0, 1, 1], [], []>} : vector<8x32xf32>, vector<32x128xf32>, vector<8x128xf32> -> vector<8x128xf32>
    %144 = arith.addf %142, %143 : vector<8x128xf32>
    %145 = arith.negf %144 : vector<8x128xf32>
    %146 = math.exp %145 : vector<8x128xf32>
    %cst_32 = arith.constant 1.000000e+00 : f32
    %147 = vector.broadcast %cst_32 : f32 to vector<8x128xf32>
    %148 = arith.addf %147, %146 : vector<8x128xf32>
    %149 = arith.divf %147, %148 : vector<8x128xf32>
    %150 = math.tanh %144 : vector<8x128xf32>
    %151 = vector.extract_strided_slice %149 {offsets = [0, 0], sizes = [8, 32], strides = [1, 1]} : vector<8x128xf32> to vector<8x32xf32>
    %152 = vector.extract_strided_slice %149 {offsets = [0, 32], sizes = [8, 32], strides = [1, 1]} : vector<8x128xf32> to vector<8x32xf32>
    %153 = vector.extract_strided_slice %150 {offsets = [0, 64], sizes = [8, 32], strides = [1, 1]} : vector<8x128xf32> to vector<8x32xf32>
    %154 = vector.extract_strided_slice %149 {offsets = [0, 96], sizes = [8, 32], strides = [1, 1]} : vector<8x128xf32> to vector<8x32xf32>
    %155 = arith.mulf %152, %119 : vector<8x32xf32>
    %156 = arith.mulf %151, %153 : vector<8x32xf32>
    %157 = arith.addf %155, %156 : vector<8x32xf32>
    %158 = math.tanh %157 : vector<8x32xf32>
    %159 = arith.mulf %154, %158 : vector<8x32xf32>
    %160 = vector.extract_strided_slice %9 {offsets = [32, 0], sizes = [8, 128], strides = [1, 1]} : vector<64x128xf32> to vector<8x128xf32>
    %cst_33 = arith.constant dense<0.000000e+00> : vector<8x128xf32>
    %161 = tpu.matmul %139, %2, %cst_33 {dimension_numbers = #tpu.dot_dimension_numbers<[1], [0], [0], [1], [0, 0, 1, 1], [], []>} : vector<8x32xf32>, vector<32x128xf32>, vector<8x128xf32> -> vector<8x128xf32>
    %162 = arith.addf %160, %161 : vector<8x128xf32>
    %163 = arith.negf %162 : vector<8x128xf32>
    %164 = math.exp %163 : vector<8x128xf32>
    %cst_34 = arith.constant 1.000000e+00 : f32
    %165 = vector.broadcast %cst_34 : f32 to vector<8x128xf32>
    %166 = arith.addf %165, %164 : vector<8x128xf32>
    %167 = arith.divf %165, %166 : vector<8x128xf32>
    %168 = math.tanh %162 : vector<8x128xf32>
    %169 = vector.extract_strided_slice %167 {offsets = [0, 0], sizes = [8, 32], strides = [1, 1]} : vector<8x128xf32> to vector<8x32xf32>
    %170 = vector.extract_strided_slice %167 {offsets = [0, 32], sizes = [8, 32], strides = [1, 1]} : vector<8x128xf32> to vector<8x32xf32>
    %171 = vector.extract_strided_slice %168 {offsets = [0, 64], sizes = [8, 32], strides = [1, 1]} : vector<8x128xf32> to vector<8x32xf32>
    %172 = vector.extract_strided_slice %167 {offsets = [0, 96], sizes = [8, 32], strides = [1, 1]} : vector<8x128xf32> to vector<8x32xf32>
    %173 = arith.mulf %170, %137 : vector<8x32xf32>
    %174 = arith.mulf %169, %171 : vector<8x32xf32>
    %175 = arith.addf %173, %174 : vector<8x32xf32>
    %176 = math.tanh %175 : vector<8x32xf32>
    %177 = arith.mulf %172, %176 : vector<8x32xf32>
    %cst_35 = arith.constant dense<0.000000e+00> : vector<8x128xf32>
    %178 = tpu.matmul %177, %1, %cst_35 {dimension_numbers = #tpu.dot_dimension_numbers<[1], [0], [0], [1], [0, 0, 1, 1], [], []>} : vector<8x32xf32>, vector<32x128xf32>, vector<8x128xf32> -> vector<8x128xf32>
    %179 = vector.broadcast %5 : vector<1x128xf32> to vector<8x128xf32>
    %180 = arith.addf %178, %179 : vector<8x128xf32>
    %cst_36 = arith.constant dense<0.000000e+00> : vector<8x128xf32>
    %181 = tpu.matmul %159, %3, %cst_36 {dimension_numbers = #tpu.dot_dimension_numbers<[1], [0], [0], [1], [0, 0, 1, 1], [], []>} : vector<8x32xf32>, vector<32x128xf32>, vector<8x128xf32> -> vector<8x128xf32>
    %182 = arith.addf %180, %181 : vector<8x128xf32>
    %183 = arith.negf %182 : vector<8x128xf32>
    %184 = math.exp %183 : vector<8x128xf32>
    %cst_37 = arith.constant 1.000000e+00 : f32
    %185 = vector.broadcast %cst_37 : f32 to vector<8x128xf32>
    %186 = arith.addf %185, %184 : vector<8x128xf32>
    %187 = arith.divf %185, %186 : vector<8x128xf32>
    %188 = math.tanh %182 : vector<8x128xf32>
    %189 = vector.extract_strided_slice %187 {offsets = [0, 0], sizes = [8, 32], strides = [1, 1]} : vector<8x128xf32> to vector<8x32xf32>
    %190 = vector.extract_strided_slice %187 {offsets = [0, 32], sizes = [8, 32], strides = [1, 1]} : vector<8x128xf32> to vector<8x32xf32>
    %191 = vector.extract_strided_slice %188 {offsets = [0, 64], sizes = [8, 32], strides = [1, 1]} : vector<8x128xf32> to vector<8x32xf32>
    %192 = vector.extract_strided_slice %187 {offsets = [0, 96], sizes = [8, 32], strides = [1, 1]} : vector<8x128xf32> to vector<8x32xf32>
    %193 = arith.mulf %190, %157 : vector<8x32xf32>
    %194 = arith.mulf %189, %191 : vector<8x32xf32>
    %195 = arith.addf %193, %194 : vector<8x32xf32>
    %196 = math.tanh %195 : vector<8x32xf32>
    %197 = arith.mulf %192, %196 : vector<8x32xf32>
    %198 = vector.extract_strided_slice %9 {offsets = [40, 0], sizes = [8, 128], strides = [1, 1]} : vector<64x128xf32> to vector<8x128xf32>
    %cst_38 = arith.constant dense<0.000000e+00> : vector<8x128xf32>
    %199 = tpu.matmul %177, %2, %cst_38 {dimension_numbers = #tpu.dot_dimension_numbers<[1], [0], [0], [1], [0, 0, 1, 1], [], []>} : vector<8x32xf32>, vector<32x128xf32>, vector<8x128xf32> -> vector<8x128xf32>
    %200 = arith.addf %198, %199 : vector<8x128xf32>
    %201 = arith.negf %200 : vector<8x128xf32>
    %202 = math.exp %201 : vector<8x128xf32>
    %cst_39 = arith.constant 1.000000e+00 : f32
    %203 = vector.broadcast %cst_39 : f32 to vector<8x128xf32>
    %204 = arith.addf %203, %202 : vector<8x128xf32>
    %205 = arith.divf %203, %204 : vector<8x128xf32>
    %206 = math.tanh %200 : vector<8x128xf32>
    %207 = vector.extract_strided_slice %205 {offsets = [0, 0], sizes = [8, 32], strides = [1, 1]} : vector<8x128xf32> to vector<8x32xf32>
    %208 = vector.extract_strided_slice %205 {offsets = [0, 32], sizes = [8, 32], strides = [1, 1]} : vector<8x128xf32> to vector<8x32xf32>
    %209 = vector.extract_strided_slice %206 {offsets = [0, 64], sizes = [8, 32], strides = [1, 1]} : vector<8x128xf32> to vector<8x32xf32>
    %210 = vector.extract_strided_slice %205 {offsets = [0, 96], sizes = [8, 32], strides = [1, 1]} : vector<8x128xf32> to vector<8x32xf32>
    %211 = arith.mulf %208, %175 : vector<8x32xf32>
    %212 = arith.mulf %207, %209 : vector<8x32xf32>
    %213 = arith.addf %211, %212 : vector<8x32xf32>
    %214 = math.tanh %213 : vector<8x32xf32>
    %215 = arith.mulf %210, %214 : vector<8x32xf32>
    %cst_40 = arith.constant dense<0.000000e+00> : vector<8x128xf32>
    %216 = tpu.matmul %215, %1, %cst_40 {dimension_numbers = #tpu.dot_dimension_numbers<[1], [0], [0], [1], [0, 0, 1, 1], [], []>} : vector<8x32xf32>, vector<32x128xf32>, vector<8x128xf32> -> vector<8x128xf32>
    %217 = vector.broadcast %5 : vector<1x128xf32> to vector<8x128xf32>
    %218 = arith.addf %216, %217 : vector<8x128xf32>
    %cst_41 = arith.constant dense<0.000000e+00> : vector<8x128xf32>
    %219 = tpu.matmul %197, %3, %cst_41 {dimension_numbers = #tpu.dot_dimension_numbers<[1], [0], [0], [1], [0, 0, 1, 1], [], []>} : vector<8x32xf32>, vector<32x128xf32>, vector<8x128xf32> -> vector<8x128xf32>
    %220 = arith.addf %218, %219 : vector<8x128xf32>
    %221 = arith.negf %220 : vector<8x128xf32>
    %222 = math.exp %221 : vector<8x128xf32>
    %cst_42 = arith.constant 1.000000e+00 : f32
    %223 = vector.broadcast %cst_42 : f32 to vector<8x128xf32>
    %224 = arith.addf %223, %222 : vector<8x128xf32>
    %225 = arith.divf %223, %224 : vector<8x128xf32>
    %226 = math.tanh %220 : vector<8x128xf32>
    %227 = vector.extract_strided_slice %225 {offsets = [0, 0], sizes = [8, 32], strides = [1, 1]} : vector<8x128xf32> to vector<8x32xf32>
    %228 = vector.extract_strided_slice %225 {offsets = [0, 32], sizes = [8, 32], strides = [1, 1]} : vector<8x128xf32> to vector<8x32xf32>
    %229 = vector.extract_strided_slice %226 {offsets = [0, 64], sizes = [8, 32], strides = [1, 1]} : vector<8x128xf32> to vector<8x32xf32>
    %230 = vector.extract_strided_slice %225 {offsets = [0, 96], sizes = [8, 32], strides = [1, 1]} : vector<8x128xf32> to vector<8x32xf32>
    %231 = arith.mulf %228, %195 : vector<8x32xf32>
    %232 = arith.mulf %227, %229 : vector<8x32xf32>
    %233 = arith.addf %231, %232 : vector<8x32xf32>
    %234 = math.tanh %233 : vector<8x32xf32>
    %235 = arith.mulf %230, %234 : vector<8x32xf32>
    %236 = vector.extract_strided_slice %9 {offsets = [48, 0], sizes = [8, 128], strides = [1, 1]} : vector<64x128xf32> to vector<8x128xf32>
    %cst_43 = arith.constant dense<0.000000e+00> : vector<8x128xf32>
    %237 = tpu.matmul %215, %2, %cst_43 {dimension_numbers = #tpu.dot_dimension_numbers<[1], [0], [0], [1], [0, 0, 1, 1], [], []>} : vector<8x32xf32>, vector<32x128xf32>, vector<8x128xf32> -> vector<8x128xf32>
    %238 = arith.addf %236, %237 : vector<8x128xf32>
    %239 = arith.negf %238 : vector<8x128xf32>
    %240 = math.exp %239 : vector<8x128xf32>
    %cst_44 = arith.constant 1.000000e+00 : f32
    %241 = vector.broadcast %cst_44 : f32 to vector<8x128xf32>
    %242 = arith.addf %241, %240 : vector<8x128xf32>
    %243 = arith.divf %241, %242 : vector<8x128xf32>
    %244 = math.tanh %238 : vector<8x128xf32>
    %245 = vector.extract_strided_slice %243 {offsets = [0, 0], sizes = [8, 32], strides = [1, 1]} : vector<8x128xf32> to vector<8x32xf32>
    %246 = vector.extract_strided_slice %243 {offsets = [0, 32], sizes = [8, 32], strides = [1, 1]} : vector<8x128xf32> to vector<8x32xf32>
    %247 = vector.extract_strided_slice %244 {offsets = [0, 64], sizes = [8, 32], strides = [1, 1]} : vector<8x128xf32> to vector<8x32xf32>
    %248 = vector.extract_strided_slice %243 {offsets = [0, 96], sizes = [8, 32], strides = [1, 1]} : vector<8x128xf32> to vector<8x32xf32>
    %249 = arith.mulf %246, %213 : vector<8x32xf32>
    %250 = arith.mulf %245, %247 : vector<8x32xf32>
    %251 = arith.addf %249, %250 : vector<8x32xf32>
    %252 = math.tanh %251 : vector<8x32xf32>
    %253 = arith.mulf %248, %252 : vector<8x32xf32>
    %cst_45 = arith.constant dense<0.000000e+00> : vector<8x128xf32>
    %254 = tpu.matmul %253, %1, %cst_45 {dimension_numbers = #tpu.dot_dimension_numbers<[1], [0], [0], [1], [0, 0, 1, 1], [], []>} : vector<8x32xf32>, vector<32x128xf32>, vector<8x128xf32> -> vector<8x128xf32>
    %255 = vector.broadcast %5 : vector<1x128xf32> to vector<8x128xf32>
    %256 = arith.addf %254, %255 : vector<8x128xf32>
    %cst_46 = arith.constant dense<0.000000e+00> : vector<8x128xf32>
    %257 = tpu.matmul %235, %3, %cst_46 {dimension_numbers = #tpu.dot_dimension_numbers<[1], [0], [0], [1], [0, 0, 1, 1], [], []>} : vector<8x32xf32>, vector<32x128xf32>, vector<8x128xf32> -> vector<8x128xf32>
    %258 = arith.addf %256, %257 : vector<8x128xf32>
    %259 = arith.negf %258 : vector<8x128xf32>
    %260 = math.exp %259 : vector<8x128xf32>
    %cst_47 = arith.constant 1.000000e+00 : f32
    %261 = vector.broadcast %cst_47 : f32 to vector<8x128xf32>
    %262 = arith.addf %261, %260 : vector<8x128xf32>
    %263 = arith.divf %261, %262 : vector<8x128xf32>
    %264 = math.tanh %258 : vector<8x128xf32>
    %265 = vector.extract_strided_slice %263 {offsets = [0, 0], sizes = [8, 32], strides = [1, 1]} : vector<8x128xf32> to vector<8x32xf32>
    %266 = vector.extract_strided_slice %263 {offsets = [0, 32], sizes = [8, 32], strides = [1, 1]} : vector<8x128xf32> to vector<8x32xf32>
    %267 = vector.extract_strided_slice %264 {offsets = [0, 64], sizes = [8, 32], strides = [1, 1]} : vector<8x128xf32> to vector<8x32xf32>
    %268 = vector.extract_strided_slice %263 {offsets = [0, 96], sizes = [8, 32], strides = [1, 1]} : vector<8x128xf32> to vector<8x32xf32>
    %269 = arith.mulf %266, %233 : vector<8x32xf32>
    %270 = arith.mulf %265, %267 : vector<8x32xf32>
    %271 = arith.addf %269, %270 : vector<8x32xf32>
    %272 = math.tanh %271 : vector<8x32xf32>
    %273 = arith.mulf %268, %272 : vector<8x32xf32>
    %274 = vector.extract_strided_slice %9 {offsets = [56, 0], sizes = [8, 128], strides = [1, 1]} : vector<64x128xf32> to vector<8x128xf32>
    %cst_48 = arith.constant dense<0.000000e+00> : vector<8x128xf32>
    %275 = tpu.matmul %253, %2, %cst_48 {dimension_numbers = #tpu.dot_dimension_numbers<[1], [0], [0], [1], [0, 0, 1, 1], [], []>} : vector<8x32xf32>, vector<32x128xf32>, vector<8x128xf32> -> vector<8x128xf32>
    %276 = arith.addf %274, %275 : vector<8x128xf32>
    %277 = arith.negf %276 : vector<8x128xf32>
    %278 = math.exp %277 : vector<8x128xf32>
    %cst_49 = arith.constant 1.000000e+00 : f32
    %279 = vector.broadcast %cst_49 : f32 to vector<8x128xf32>
    %280 = arith.addf %279, %278 : vector<8x128xf32>
    %281 = arith.divf %279, %280 : vector<8x128xf32>
    %282 = math.tanh %276 : vector<8x128xf32>
    %283 = vector.extract_strided_slice %281 {offsets = [0, 0], sizes = [8, 32], strides = [1, 1]} : vector<8x128xf32> to vector<8x32xf32>
    %284 = vector.extract_strided_slice %281 {offsets = [0, 32], sizes = [8, 32], strides = [1, 1]} : vector<8x128xf32> to vector<8x32xf32>
    %285 = vector.extract_strided_slice %282 {offsets = [0, 64], sizes = [8, 32], strides = [1, 1]} : vector<8x128xf32> to vector<8x32xf32>
    %286 = vector.extract_strided_slice %281 {offsets = [0, 96], sizes = [8, 32], strides = [1, 1]} : vector<8x128xf32> to vector<8x32xf32>
    %287 = arith.mulf %284, %251 : vector<8x32xf32>
    %288 = arith.mulf %283, %285 : vector<8x32xf32>
    %289 = arith.addf %287, %288 : vector<8x32xf32>
    %290 = math.tanh %289 : vector<8x32xf32>
    %291 = arith.mulf %286, %290 : vector<8x32xf32>
    %cst_50 = arith.constant dense<0.000000e+00> : vector<8x128xf32>
    %292 = tpu.matmul %291, %1, %cst_50 {dimension_numbers = #tpu.dot_dimension_numbers<[1], [0], [0], [1], [0, 0, 1, 1], [], []>} : vector<8x32xf32>, vector<32x128xf32>, vector<8x128xf32> -> vector<8x128xf32>
    %293 = vector.broadcast %5 : vector<1x128xf32> to vector<8x128xf32>
    %294 = arith.addf %292, %293 : vector<8x128xf32>
    %cst_51 = arith.constant dense<0.000000e+00> : vector<8x128xf32>
    %295 = tpu.matmul %273, %3, %cst_51 {dimension_numbers = #tpu.dot_dimension_numbers<[1], [0], [0], [1], [0, 0, 1, 1], [], []>} : vector<8x32xf32>, vector<32x128xf32>, vector<8x128xf32> -> vector<8x128xf32>
    %296 = arith.addf %294, %295 : vector<8x128xf32>
    %297 = arith.negf %296 : vector<8x128xf32>
    %298 = math.exp %297 : vector<8x128xf32>
    %cst_52 = arith.constant 1.000000e+00 : f32
    %299 = vector.broadcast %cst_52 : f32 to vector<8x128xf32>
    %300 = arith.addf %299, %298 : vector<8x128xf32>
    %301 = arith.divf %299, %300 : vector<8x128xf32>
    %302 = math.tanh %296 : vector<8x128xf32>
    %303 = vector.extract_strided_slice %301 {offsets = [0, 0], sizes = [8, 32], strides = [1, 1]} : vector<8x128xf32> to vector<8x32xf32>
    %304 = vector.extract_strided_slice %301 {offsets = [0, 32], sizes = [8, 32], strides = [1, 1]} : vector<8x128xf32> to vector<8x32xf32>
    %305 = vector.extract_strided_slice %302 {offsets = [0, 64], sizes = [8, 32], strides = [1, 1]} : vector<8x128xf32> to vector<8x32xf32>
    %306 = vector.extract_strided_slice %301 {offsets = [0, 96], sizes = [8, 32], strides = [1, 1]} : vector<8x128xf32> to vector<8x32xf32>
    %307 = arith.mulf %304, %271 : vector<8x32xf32>
    %308 = arith.mulf %303, %305 : vector<8x32xf32>
    %309 = arith.addf %307, %308 : vector<8x32xf32>
    %310 = math.tanh %309 : vector<8x32xf32>
    %311 = arith.mulf %306, %310 : vector<8x32xf32>
    %c0_53 = arith.constant 0 : index
    %c0_54 = arith.constant 0 : index
    %312 = vector.load %arg7[%c0_53, %c0_54] : memref<32x16xf32, #tpu.memory_space<vmem>>, vector<32x16xf32>
    %cst_55 = arith.constant dense<0.000000e+00> : vector<8x16xf32>
    %313 = tpu.matmul %311, %312, %cst_55 {dimension_numbers = #tpu.dot_dimension_numbers<[1], [0], [0], [1], [0, 0, 1, 1], [], []>} : vector<8x32xf32>, vector<32x16xf32>, vector<8x16xf32> -> vector<8x16xf32>
    %c0_56 = arith.constant 0 : index
    %c0_57 = arith.constant 0 : index
    %314 = vector.load %arg8[%c0_56, %c0_57] : memref<1x16xf32, #tpu.memory_space<vmem>>, vector<1x16xf32>
    %315 = vector.broadcast %314 : vector<1x16xf32> to vector<8x16xf32>
    %316 = arith.addf %313, %315 : vector<8x16xf32>
    %cst_58 = arith.constant 0.000000e+00 : f32
    %317 = vector.broadcast %cst_58 : f32 to vector<8x16xf32>
    %318 = arith.maximumf %316, %317 : vector<8x16xf32>
    %c0_59 = arith.constant 0 : index
    %c0_60 = arith.constant 0 : index
    %319 = vector.load %arg9[%c0_59, %c0_60] : memref<16x1xf32, #tpu.memory_space<vmem>>, vector<16x1xf32>
    %cst_61 = arith.constant dense<0.000000e+00> : vector<8x1xf32>
    %320 = tpu.matmul %318, %319, %cst_61 {dimension_numbers = #tpu.dot_dimension_numbers<[1], [0], [0], [1], [0, 0, 1, 1], [], []>} : vector<8x16xf32>, vector<16x1xf32>, vector<8x1xf32> -> vector<8x1xf32>
    %c0_62 = arith.constant 0 : index
    %c0_63 = arith.constant 0 : index
    %321 = vector.load %arg10[%c0_62, %c0_63] : memref<1x1xf32, #tpu.memory_space<vmem>>, vector<1x1xf32>
    %322 = vector.broadcast %321 : vector<1x1xf32> to vector<8x1xf32>
    %323 = arith.addf %320, %322 : vector<8x1xf32>
    %c0_64 = arith.constant 0 : index
    %c0_65 = arith.constant 0 : index
    %324 = vector.load %arg11[%c0_64, %c0_65] : memref<8x1xf32, #tpu.memory_space<vmem>>, vector<8x1xf32>
    tpu.vector_store %arg11[%c0_64, %c0_65], %323 {strides = array<i32>} : memref<8x1xf32, #tpu.memory_space<vmem>>, vector<8x1xf32>,
    return
  }
}

</mosaic_0001>

<llo_original>
// kernel: _lambda_.1
$region0: #{_lambda_.1}
  #allocation0 [shape = 'u32[]', space=smem, size = 0x4, offset = 0x4, fixed_abs, tag = 'smem constant byte address 0x4 - core index']
  #allocation1 [shape = 'u32[72,128]{1,0:T(1,128)}', space=vmem, size = 0x9000, scoped, tag = 'internal scratch']
  #allocation2 [shape = 'f32[1,1]{1,0:T(1,128)S(1)}', space=vmem, size = 0x200, scoped, tag = 'scoped memory for _lambda_.1']
  %s0 = inlined_call_operand.vmem [shape: f32[64,16], index: 0, kind: input, shape index: {}]
  %s1 = inlined_call_operand.vmem [shape: f32[16,128], index: 1, kind: input, shape index: {}]
  %s2 = inlined_call_operand.vmem [shape: f32[32,128], index: 2, kind: input, shape index: {}]
  %s3 = inlined_call_operand.vmem [shape: f32[1,128], index: 3, kind: input, shape index: {}]
  %s4 = inlined_call_operand.vmem [shape: f32[32,128], index: 4, kind: input, shape index: {}]
  %s5 = inlined_call_operand.vmem [shape: f32[32,128], index: 5, kind: input, shape index: {}]
  %s6 = inlined_call_operand.vmem [shape: f32[1,128], index: 6, kind: input, shape index: {}]
  %s7 = inlined_call_operand.vmem [shape: f32[32,16], index: 7, kind: input, shape index: {}]
  %s8 = inlined_call_operand.vmem [shape: f32[1,16], index: 8, kind: input, shape index: {}]
  %s9 = inlined_call_operand.vmem [shape: f32[16,1], index: 9, kind: input, shape index: {}]
  %s10 = inlined_call_operand.<no memory space> [shape: f32[1,1], index: 10, kind: input, shape index: {}]
  %s11 = inlined_call_operand.vmem [shape: f32[8,1], index: 11, kind: output, shape index: {}]
  %s12 = sld [smem:[#allocation0]]
  $region54: #{_lambda_.1} parent=0
    _
  %s14 = ssub.s32 1, %s12
  %s15 = scalar_select 0, %s14, %s12
  %v16 = vstv %s10
  %17 = vst [vmem:[#allocation2] sm:$0x1] %v16
  // Predicated region
  $region2: #{_lambda_.1} parent=0 // pred_check
    _
  $region3: #{_lambda_.1} parent=0 // pred_check_branch
    %19 = sbr.rel (0) target = $region5
  $region4: #{_lambda_.1} parent=0 // pred_region
    _
  $region5: #{_lambda_.1} parent=0 // pred_fallthru
    _
  // Predicated region
  $region6: #{_lambda_.1} parent=0 // pred_check
    _
  $region7: #{_lambda_.1} parent=0 // pred_check_branch
    %21 = sbr.rel (0) target = $region9
  $region8: #{_lambda_.1} parent=0 // pred_region
    _
  $region9: #{_lambda_.1} parent=0 // pred_fallthru
    _
  // Predicated region
  $region10: #{_lambda_.1} parent=0 // pred_check
    _
  $region11: #{_lambda_.1} parent=0 // pred_check_branch
    %23 = sbr.rel (0) target = $region13
  $region12: #{_lambda_.1} parent=0 // pred_region
    _
  $region13: #{_lambda_.1} parent=0 // pred_fallthru
    _
  // Predicated region
  $region14: #{_lambda_.1} parent=0 // pred_check
    _
  $region15: #{_lambda_.1} parent=0 // pred_check_branch
    %25 = sbr.rel (0) target = $region17
  $region16: #{_lambda_.1} parent=0 // pred_region
    _
  $region17: #{_lambda_.1} parent=0 // pred_fallthru
    _
  // Predicated region
  $region18: #{_lambda_.1} parent=0 // pred_check
    _
  $region19: #{_lambda_.1} parent=0 // pred_check_branch
    %27 = sbr.rel (0) target = $region21
  $region20: #{_lambda_.1} parent=0 // pred_region
    _
  $region21: #{_lambda_.1} parent=0 // pred_fallthru
    _
  // Predicated region
  $region22: #{_lambda_.1} parent=0 // pred_check
    _
  $region23: #{_lambda_.1} parent=0 // pred_check_branch
    %29 = sbr.rel (0) target = $region25
  $region24: #{_lambda_.1} parent=0 // pred_region
    _
  $region25: #{_lambda_.1} parent=0 // pred_fallthru
    _
  // Predicated region
  $region26: #{_lambda_.1} parent=0 // pred_check
    _
  $region27: #{_lambda_.1} parent=0 // pred_check_branch
    %31 = sbr.rel (0) target = $region29
  $region28: #{_lambda_.1} parent=0 // pred_region
    _
  $region29: #{_lambda_.1} parent=0 // pred_fallthru
    _
  // Predicated region
  $region30: #{_lambda_.1} parent=0 // pred_check
    _
  $region31: #{_lambda_.1} parent=0 // pred_check_branch
    %33 = sbr.rel (0) target = $region33
  $region32: #{_lambda_.1} parent=0 // pred_region
    _
  $region33: #{_lambda_.1} parent=0 // pred_fallthru
    _
  // Predicated region
  $region34: #{_lambda_.1} parent=0 // pred_check
    _
  $region35: #{_lambda_.1} parent=0 // pred_check_branch
    %35 = sbr.rel (0) target = $region37
  $region36: #{_lambda_.1} parent=0 // pred_region
    _
  $region37: #{_lambda_.1} parent=0 // pred_fallthru
    _
  // Predicated region
  $region38: #{_lambda_.1} parent=0 // pred_check
    _
  $region39: #{_lambda_.1} parent=0 // pred_check_branch
    %37 = sbr.rel (0) target = $region41
  $region40: #{_lambda_.1} parent=0 // pred_region
    _
  $region41: #{_lambda_.1} parent=0 // pred_fallthru
    _
  // Predicated region
  $region42: #{_lambda_.1} parent=0 // pred_check
    _
  $region43: #{_lambda_.1} parent=0 // pred_check_branch
    %39 = sbr.rel (0) target = $region45
  $region44: #{_lambda_.1} parent=0 // pred_region
    _
  $region45: #{_lambda_.1} parent=0 // pred_fallthru
    _
  %v40 = vld [vmem:[%s1] sm:$0xff]
  %v41 = vld [vmem:[%s1 + $0x8] sm:$0xff]
  %v42 = vld [vmem:[%s4] sm:$0xff]
  %v43 = vld [vmem:[%s4 + $0x8] sm:$0xff]
  %v44 = vld [vmem:[%s4 + $0x10] sm:$0xff]
  %v45 = vld [vmem:[%s4 + $0x18] sm:$0xff]
  %v46 = vld [vmem:[%s2] sm:$0xff]
  %v47 = vld [vmem:[%s2 + $0x8] sm:$0xff]
  %v48 = vld [vmem:[%s2 + $0x10] sm:$0xff]
  %v49 = vld [vmem:[%s2 + $0x18] sm:$0xff]
  %v50 = vld [vmem:[%s5] sm:$0xff]
  %v51 = vld [vmem:[%s5 + $0x8] sm:$0xff]
  %v52 = vld [vmem:[%s5 + $0x10] sm:$0xff]
  %v53 = vld [vmem:[%s5 + $0x18] sm:$0xff]
  %v54 = vld [vmem:[%s3] sm:$0x1]
  %v55 = vld [vmem:[%s6] sm:$0x1]
  %v56 = vld [vmem:[%s0] sm:$0xff]
  %v57 = vld [vmem:[%s0 + $0x8] sm:$0xff]
  %v58 = vld [vmem:[%s0 + $0x10] sm:$0xff]
  %v59 = vld [vmem:[%s0 + $0x18] sm:$0xff]
  %v60 = vld [vmem:[%s0 + $0x20] sm:$0xff]
  %v61 = vld [vmem:[%s0 + $0x28] sm:$0xff]
  %v62 = vld [vmem:[%s0 + $0x30] sm:$0xff]
  %v63 = vld [vmem:[%s0 + $0x38] sm:$0xff]
  %v65 = vperm.slane %v54, 0
  %vm67 = vcmask 130048
  %v69 = vsel %vm67, %v56, 0
  %v72 = vsel %vm67, %v57, 0
  %v75 = vsel %vm67, %v58, 0
  %v78 = vsel %vm67, %v59, 0
  %v81 = vsel %vm67, %v60, 0
  %v84 = vsel %vm67, %v61, 0
  %v87 = vsel %vm67, %v62, 0
  %v90 = vsel %vm67, %v63, 0
  %92 = vmatpush.msra.mxu0 0.0
  %93 = vmatpush.msra.mxu0 0.0
  %94 = vmatpush.msra.mxu0 0.0
  %95 = vmatpush.msra.mxu0 0.0
  %96 = vmatpush.msra.mxu0 0.0
  %97 = vmatpush.msra.mxu0 0.0
  %98 = vmatpush.msra.mxu0 0.0
  %99 = vmatpush.msra.mxu0 0.0
  %100 = vmatpush.msra.mxu0 0.0
  %101 = vmatpush.msra.mxu0 0.0
  %102 = vmatpush.msra.mxu0 0.0
  %103 = vmatpush.msra.mxu0 0.0
  %104 = vmatpush.msra.mxu0 0.0
  %105 = vmatpush.msra.mxu0 0.0
  %106 = vmatpush.msra.mxu0 %v41
  %107 = vmatpush.msra.mxu0 %v40
  %108 = vmatmul.f32.gmra.mxu0 %v69
  %v109 = vpop.f32.mrf.mxu0
  %v110 = vadd.f32 %v65, %v109
  %111 = vmatmul.f32.gmra.mxu0 %v72
  %v112 = vpop.f32.mrf.mxu0
  %v113 = vadd.f32 %v65, %v112
  %114 = vmatmul.f32.gmra.mxu0 %v75
  %v115 = vpop.f32.mrf.mxu0
  %v116 = vadd.f32 %v65, %v115
  %117 = vmatmul.f32.gmra.mxu0 %v78
  %v118 = vpop.f32.mrf.mxu0
  %v119 = vadd.f32 %v65, %v118
  %120 = vmatmul.f32.gmra.mxu0 %v81
  %v121 = vpop.f32.mrf.mxu0
  %v122 = vadd.f32 %v65, %v121
  %123 = vmatmul.f32.gmra.mxu0 %v84
  %v124 = vpop.f32.mrf.mxu0
  %v125 = vadd.f32 %v65, %v124
  %126 = vmatmul.f32.gmra.mxu0 %v87
  %v127 = vpop.f32.mrf.mxu0
  %v128 = vadd.f32 %v65, %v127
  %129 = vmatmul.f32.gmra.mxu0 %v90
  %v130 = vpop.f32.mrf.mxu0
  %v131 = vadd.f32 %v65, %v130
  %132 = vdwg.mxu0
  %v133 = vxor.u32 %v110, 2147483648
  %v134 = vmul.f32 %v133, 1.442695
  %v135 = vpow.pop %v134
  %v136 = vadd.f32 %v135, 1.0
  %v137 = vrcp.pop %v136
  %v138 = vmul.f32 %v136, %v137
  %v139 = vsub.f32 1.0, %v138
  %v140 = vmul.f32 %v137, %v139
  %v141 = vadd.f32 %v137, %v140
  %vm142 = vweird.f32 %v136
  %vm143 = vweird.f32 %v137
  %vm144 = vmor %vm142, %vm143
  %v145 = vsel %vm144, %v137, %v141
  %v146 = vand.u32 2147483647, %v136
  %vm147 = vcmp.eq.f32.partialorder %v146, 8.507059e+37
  %v148 = vand.u32 %v136, 2147483648
  %v149 = vor.u32 1.1754944e-38, %v148
  %v150 = vsel %vm147, %v149, %v145
  %v151 = vmul.f32 1.0, %v150
  %v152 = vtanh.pop %v110
  %v153 = vmul.f32 %v151, 0.0
  %155 = vrot.lane.b32.xlu0 %v152, 64
  %v156 = vpop.permute.xlu0 %155
  %v158 = vmul.f32 %v151, %v156
  %160 = vrot.lane.b32.xlu0 %v158, 32
  %v161 = vpop.permute.xlu0 %160
  %v163 = vadd.f32 %v153, %v161
  %v164 = vtanh.pop %v163
  %166 = vrot.lane.b32.xlu0 %v164, 64
  %v167 = vpop.permute.xlu0 %166
  %v169 = vmul.f32 %v151, %v167
  %v171 = vperm.slane %v55, 0
  %174 = vrot.lane.b32.xlu0 %v169, 32
  %v175 = vpop.permute.xlu0 %174
  %vm176 = vcmask 261120
  %v177 = vsel %vm176, %v175, 0
  %179 = vmatpush.msra.mxu0 0.0
  %180 = vmatpush.msra.mxu0 0.0
  %181 = vmatpush.msra.mxu0 0.0
  %182 = vmatpush.msra.mxu0 0.0
  %183 = vmatpush.msra.mxu0 0.0
  %184 = vmatpush.msra.mxu0 0.0
  %185 = vmatpush.msra.mxu0 0.0
  %186 = vmatpush.msra.mxu0 0.0
  %187 = vmatpush.msra.mxu0 0.0
  %188 = vmatpush.msra.mxu0 0.0
  %189 = vmatpush.msra.mxu0 0.0
  %190 = vmatpush.msra.mxu0 0.0
  %191 = vmatpush.msra.mxu0 %v45
  %192 = vmatpush.msra.mxu0 %v44
  %193 = vmatpush.msra.mxu0 %v43
  %194 = vmatpush.msra.mxu0 %v42
  %195 = vmatmul.f32.gmra.mxu0 %v177
  %v196 = vpop.f32.mrf.mxu0
  %v197 = vadd.f32 %v171, %v196
  %198 = vdwg.mxu0
  %v199 = vxor.u32 %v197, 2147483648
  %v200 = vmul.f32 %v199, 1.442695
  %v201 = vpow.pop %v200
  %v202 = vadd.f32 %v201, 1.0
  %v203 = vrcp.pop %v202
  %v204 = vmul.f32 %v202, %v203
  %v205 = vsub.f32 1.0, %v204
  %v206 = vmul.f32 %v203, %v205
  %v207 = vadd.f32 %v203, %v206
  %vm208 = vweird.f32 %v202
  %vm209 = vweird.f32 %v203
  %vm210 = vmor %vm208, %vm209
  %v211 = vsel %vm210, %v203, %v207
  %v212 = vand.u32 2147483647, %v202
  %vm213 = vcmp.eq.f32.partialorder %v212, 8.507059e+37
  %v214 = vand.u32 %v202, 2147483648
  %v215 = vor.u32 1.1754944e-38, %v214
  %v216 = vsel %vm213, %v215, %v211
  %v217 = vmul.f32 1.0, %v216
  %v218 = vtanh.pop %v197
  %v219 = vmul.f32 %v217, 0.0
  %221 = vrot.lane.b32.xlu0 %v218, 64
  %v222 = vpop.permute.xlu0 %221
  %v224 = vmul.f32 %v217, %v222
  %226 = vrot.lane.b32.xlu0 %v224, 32
  %v227 = vpop.permute.xlu0 %226
  %v229 = vadd.f32 %v219, %v227
  %v230 = vtanh.pop %v229
  %232 = vrot.lane.b32.xlu0 %v230, 64
  %v233 = vpop.permute.xlu0 %232
  %v235 = vmul.f32 %v217, %v233
  %236 = vmatpush.msra.mxu0 0.0
  %237 = vmatpush.msra.mxu0 0.0
  %238 = vmatpush.msra.mxu0 0.0
  %239 = vmatpush.msra.mxu0 0.0
  %240 = vmatpush.msra.mxu0 0.0
  %241 = vmatpush.msra.mxu0 0.0
  %242 = vmatpush.msra.mxu0 0.0
  %243 = vmatpush.msra.mxu0 0.0
  %244 = vmatpush.msra.mxu0 0.0
  %245 = vmatpush.msra.mxu0 0.0
  %246 = vmatpush.msra.mxu0 0.0
  %247 = vmatpush.msra.mxu0 0.0
  %248 = vmatpush.msra.mxu0 %v49
  %249 = vmatpush.msra.mxu0 %v48
  %250 = vmatpush.msra.mxu0 %v47
  %251 = vmatpush.msra.mxu0 %v46
  %252 = vmatmul.f32.gmra.mxu0 %v177
  %v253 = vpop.f32.mrf.mxu0
  %v254 = vadd.f32 0.0, %v253
  %255 = vdwg.mxu0
  %v256 = vadd.f32 %v113, %v254
  %v257 = vxor.u32 %v256, 2147483648
  %v258 = vmul.f32 %v257, 1.442695
  %v259 = vpow.pop %v258
  %v260 = vadd.f32 %v259, 1.0
  %v261 = vrcp.pop %v260
  %v262 = vmul.f32 %v260, %v261
  %v263 = vsub.f32 1.0, %v262
  %v264 = vmul.f32 %v261, %v263
  %v265 = vadd.f32 %v261, %v264
  %vm266 = vweird.f32 %v260
  %vm267 = vweird.f32 %v261
  %vm268 = vmor %vm266, %vm267
  %v269 = vsel %vm268, %v261, %v265
  %v270 = vand.u32 2147483647, %v260
  %vm271 = vcmp.eq.f32.partialorder %v270, 8.507059e+37
  %v272 = vand.u32 %v260, 2147483648
  %v273 = vor.u32 1.1754944e-38, %v272
  %v274 = vsel %vm271, %v273, %v269
  %v275 = vmul.f32 1.0, %v274
  %v276 = vtanh.pop %v256
  %v277 = vmul.f32 %v275, %v163
  %279 = vrot.lane.b32.xlu0 %v276, 64
  %v280 = vpop.permute.xlu0 %279
  %v282 = vmul.f32 %v275, %v280
  %284 = vrot.lane.b32.xlu0 %v282, 32
  %v285 = vpop.permute.xlu0 %284
  %v287 = vadd.f32 %v277, %v285
  %v288 = vtanh.pop %v287
  %290 = vrot.lane.b32.xlu0 %v288, 64
  %v291 = vpop.permute.xlu0 %290
  %v293 = vmul.f32 %v275, %v291
  %295 = vrot.lane.b32.xlu0 %v293, 32
  %v296 = vpop.permute.xlu0 %295
  %v297 = vsel %vm176, %v296, 0
  %299 = vmatpush.msra.mxu0 0.0
  %300 = vmatpush.msra.mxu0 0.0
  %301 = vmatpush.msra.mxu0 0.0
  %302 = vmatpush.msra.mxu0 0.0
  %303 = vmatpush.msra.mxu0 0.0
  %304 = vmatpush.msra.mxu0 0.0
  %305 = vmatpush.msra.mxu0 0.0
  %306 = vmatpush.msra.mxu0 0.0
  %307 = vmatpush.msra.mxu0 0.0
  %308 = vmatpush.msra.mxu0 0.0
  %309 = vmatpush.msra.mxu0 0.0
  %310 = vmatpush.msra.mxu0 0.0
  %311 = vmatpush.msra.mxu0 %v45
  %312 = vmatpush.msra.mxu0 %v44
  %313 = vmatpush.msra.mxu0 %v43
  %314 = vmatpush.msra.mxu0 %v42
  %315 = vmatmul.f32.gmra.mxu0 %v297
  %v316 = vpop.f32.mrf.mxu0
  %v317 = vadd.f32 %v171, %v316
  %318 = vdwg.mxu0
  %320 = vrot.lane.b32.xlu0 %v235, 32
  %v321 = vpop.permute.xlu0 %320
  %v322 = vsel %vm176, %v321, 0
  %324 = vmatpush.msra.mxu0 0.0
  %325 = vmatpush.msra.mxu0 0.0
  %326 = vmatpush.msra.mxu0 0.0
  %327 = vmatpush.msra.mxu0 0.0
  %328 = vmatpush.msra.mxu0 0.0
  %329 = vmatpush.msra.mxu0 0.0
  %330 = vmatpush.msra.mxu0 0.0
  %331 = vmatpush.msra.mxu0 0.0
  %332 = vmatpush.msra.mxu0 0.0
  %333 = vmatpush.msra.mxu0 0.0
  %334 = vmatpush.msra.mxu0 0.0
  %335 = vmatpush.msra.mxu0 0.0
  %336 = vmatpush.msra.mxu0 %v53
  %337 = vmatpush.msra.mxu0 %v52
  %338 = vmatpush.msra.mxu0 %v51
  %339 = vmatpush.msra.mxu0 %v50
  %340 = vmatmul.f32.gmra.mxu0 %v322
  %v341 = vpop.f32.mrf.mxu0
  %v342 = vadd.f32 0.0, %v341
  %343 = vdwg.mxu0
  %v344 = vadd.f32 %v317, %v342
  %v345 = vxor.u32 %v344, 2147483648
  %v346 = vmul.f32 %v345, 1.442695
  %v347 = vpow.pop %v346
  %v348 = vadd.f32 %v347, 1.0
  %v349 = vrcp.pop %v348
  %v350 = vmul.f32 %v348, %v349
  %v351 = vsub.f32 1.0, %v350
  %v352 = vmul.f32 %v349, %v351
  %v353 = vadd.f32 %v349, %v352
  %vm354 = vweird.f32 %v348
  %vm355 = vweird.f32 %v349
  %vm356 = vmor %vm354, %vm355
  %v357 = vsel %vm356, %v349, %v353
  %v358 = vand.u32 2147483647, %v348
  %vm359 = vcmp.eq.f32.partialorder %v358, 8.507059e+37
  %v360 = vand.u32 %v348, 2147483648
  %v361 = vor.u32 1.1754944e-38, %v360
  %v362 = vsel %vm359, %v361, %v357
  %v363 = vmul.f32 1.0, %v362
  %v364 = vtanh.pop %v344
  %v365 = vmul.f32 %v363, %v229
  %367 = vrot.lane.b32.xlu0 %v364, 64
  %v368 = vpop.permute.xlu0 %367
  %v370 = vmul.f32 %v363, %v368
  %372 = vrot.lane.b32.xlu0 %v370, 32
  %v373 = vpop.permute.xlu0 %372
  %v375 = vadd.f32 %v365, %v373
  %v376 = vtanh.pop %v375
  %378 = vrot.lane.b32.xlu0 %v376, 64
  %v379 = vpop.permute.xlu0 %378
  %v381 = vmul.f32 %v363, %v379
  %382 = vmatpush.msra.mxu0 0.0
  %383 = vmatpush.msra.mxu0 0.0
  %384 = vmatpush.msra.mxu0 0.0
  %385 = vmatpush.msra.mxu0 0.0
  %386 = vmatpush.msra.mxu0 0.0
  %387 = vmatpush.msra.mxu0 0.0
  %388 = vmatpush.msra.mxu0 0.0
  %389 = vmatpush.msra.mxu0 0.0
  %390 = vmatpush.msra.mxu0 0.0
  %391 = vmatpush.msra.mxu0 0.0
  %392 = vmatpush.msra.mxu0 0.0
  %393 = vmatpush.msra.mxu0 0.0
  %394 = vmatpush.msra.mxu0 %v49
  %395 = vmatpush.msra.mxu0 %v48
  %396 = vmatpush.msra.mxu0 %v47
  %397 = vmatpush.msra.mxu0 %v46
  %398 = vmatmul.f32.gmra.mxu0 %v297
  %v399 = vpop.f32.mrf.mxu0
  %v400 = vadd.f32 0.0, %v399
  %401 = vdwg.mxu0
  %v402 = vadd.f32 %v116, %v400
  %v403 = vxor.u32 %v402, 2147483648
  %v404 = vmul.f32 %v403, 1.442695
  %v405 = vpow.pop %v404
  %v406 = vadd.f32 %v405, 1.0
  %v407 = vrcp.pop %v406
  %v408 = vmul.f32 %v406, %v407
  %v409 = vsub.f32 1.0, %v408
  %v410 = vmul.f32 %v407, %v409
  %v411 = vadd.f32 %v407, %v410
  %vm412 = vweird.f32 %v406
  %vm413 = vweird.f32 %v407
  %vm414 = vmor %vm412, %vm413
  %v415 = vsel %vm414, %v407, %v411
  %v416 = vand.u32 2147483647, %v406
  %vm417 = vcmp.eq.f32.partialorder %v416, 8.507059e+37
  %v418 = vand.u32 %v406, 2147483648
  %v419 = vor.u32 1.1754944e-38, %v418
  %v420 = vsel %vm417, %v419, %v415
  %v421 = vmul.f32 1.0, %v420
  %v422 = vtanh.pop %v402
  %v423 = vmul.f32 %v421, %v287
  %425 = vrot.lane.b32.xlu0 %v422, 64
  %v426 = vpop.permute.xlu0 %425
  %v428 = vmul.f32 %v421, %v426
  %430 = vrot.lane.b32.xlu0 %v428, 32
  %v431 = vpop.permute.xlu0 %430
  %v433 = vadd.f32 %v423, %v431
  %v434 = vtanh.pop %v433
  %436 = vrot.lane.b32.xlu0 %v434, 64
  %v437 = vpop.permute.xlu0 %436
  %v439 = vmul.f32 %v421, %v437
  %441 = vrot.lane.b32.xlu0 %v439, 32
  %v442 = vpop.permute.xlu0 %441
  %v443 = vsel %vm176, %v442, 0
  %445 = vmatpush.msra.mxu0 0.0
  %446 = vmatpush.msra.mxu0 0.0
  %447 = vmatpush.msra.mxu0 0.0
  %448 = vmatpush.msra.mxu0 0.0
  %449 = vmatpush.msra.mxu0 0.0
  %450 = vmatpush.msra.mxu0 0.0
  %451 = vmatpush.msra.mxu0 0.0
  %452 = vmatpush.msra.mxu0 0.0
  %453 = vmatpush.msra.mxu0 0.0
  %454 = vmatpush.msra.mxu0 0.0
  %455 = vmatpush.msra.mxu0 0.0
  %456 = vmatpush.msra.mxu0 0.0
  %457 = vmatpush.msra.mxu0 %v45
  %458 = vmatpush.msra.mxu0 %v44
  %459 = vmatpush.msra.mxu0 %v43
  %460 = vmatpush.msra.mxu0 %v42
  %461 = vmatmul.f32.gmra.mxu0 %v443
  %v462 = vpop.f32.mrf.mxu0
  %v463 = vadd.f32 %v171, %v462
  %464 = vdwg.mxu0
  %466 = vrot.lane.b32.xlu0 %v381, 32
  %v467 = vpop.permute.xlu0 %466
  %v468 = vsel %vm176, %v467, 0
  %470 = vmatpush.msra.mxu0 0.0
  %471 = vmatpush.msra.mxu0 0.0
  %472 = vmatpush.msra.mxu0 0.0
  %473 = vmatpush.msra.mxu0 0.0
  %474 = vmatpush.msra.mxu0 0.0
  %475 = vmatpush.msra.mxu0 0.0
  %476 = vmatpush.msra.mxu0 0.0
  %477 = vmatpush.msra.mxu0 0.0
  %478 = vmatpush.msra.mxu0 0.0
  %479 = vmatpush.msra.mxu0 0.0
  %480 = vmatpush.msra.mxu0 0.0
  %481 = vmatpush.msra.mxu0 0.0
  %482 = vmatpush.msra.mxu0 %v53
  %483 = vmatpush.msra.mxu0 %v52
  %484 = vmatpush.msra.mxu0 %v51
  %485 = vmatpush.msra.mxu0 %v50
  %486 = vmatmul.f32.gmra.mxu0 %v468
  %v487 = vpop.f32.mrf.mxu0
  %v488 = vadd.f32 0.0, %v487
  %489 = vdwg.mxu0
  %v490 = vadd.f32 %v463, %v488
  %v491 = vxor.u32 %v490, 2147483648
  %v492 = vmul.f32 %v491, 1.442695
  %v493 = vpow.pop %v492
  %v494 = vadd.f32 %v493, 1.0
  %v495 = vrcp.pop %v494
  %v496 = vmul.f32 %v494, %v495
  %v497 = vsub.f32 1.0, %v496
  %v498 = vmul.f32 %v495, %v497
  %v499 = vadd.f32 %v495, %v498
  %vm500 = vweird.f32 %v494
  %vm501 = vweird.f32 %v495
  %vm502 = vmor %vm500, %vm501
  %v503 = vsel %vm502, %v495, %v499
  %v504 = vand.u32 2147483647, %v494
  %vm505 = vcmp.eq.f32.partialorder %v504, 8.507059e+37
  %v506 = vand.u32 %v494, 2147483648
  %v507 = vor.u32 1.1754944e-38, %v506
  %v508 = vsel %vm505, %v507, %v503
  %v509 = vmul.f32 1.0, %v508
  %v510 = vtanh.pop %v490
  %v511 = vmul.f32 %v509, %v375
  %513 = vrot.lane.b32.xlu0 %v510, 64
  %v514 = vpop.permute.xlu0 %513
  %v516 = vmul.f32 %v509, %v514
  %518 = vrot.lane.b32.xlu0 %v516, 32
  %v519 = vpop.permute.xlu0 %518
  %v521 = vadd.f32 %v511, %v519
  %v522 = vtanh.pop %v521
  %524 = vrot.lane.b32.xlu0 %v522, 64
  %v525 = vpop.permute.xlu0 %524
  %v527 = vmul.f32 %v509, %v525
  %528 = vmatpush.msra.mxu0 0.0
  %529 = vmatpush.msra.mxu0 0.0
  %530 = vmatpush.msra.mxu0 0.0
  %531 = vmatpush.msra.mxu0 0.0
  %532 = vmatpush.msra.mxu0 0.0
  %533 = vmatpush.msra.mxu0 0.0
  %534 = vmatpush.msra.mxu0 0.0
  %535 = vmatpush.msra.mxu0 0.0
  %536 = vmatpush.msra.mxu0 0.0
  %537 = vmatpush.msra.mxu0 0.0
  %538 = vmatpush.msra.mxu0 0.0
  %539 = vmatpush.msra.mxu0 0.0
  %540 = vmatpush.msra.mxu0 %v49
  %541 = vmatpush.msra.mxu0 %v48
  %542 = vmatpush.msra.mxu0 %v47
  %543 = vmatpush.msra.mxu0 %v46
  %544 = vmatmul.f32.gmra.mxu0 %v443
  %v545 = vpop.f32.mrf.mxu0
  %v546 = vadd.f32 0.0, %v545
  %547 = vdwg.mxu0
  %v548 = vadd.f32 %v119, %v546
  %v549 = vxor.u32 %v548, 2147483648
  %v550 = vmul.f32 %v549, 1.442695
  %v551 = vpow.pop %v550
  %v552 = vadd.f32 %v551, 1.0
  %v553 = vrcp.pop %v552
  %v554 = vmul.f32 %v552, %v553
  %v555 = vsub.f32 1.0, %v554
  %v556 = vmul.f32 %v553, %v555
  %v557 = vadd.f32 %v553, %v556
  %vm558 = vweird.f32 %v552
  %vm559 = vweird.f32 %v553
  %vm560 = vmor %vm558, %vm559
  %v561 = vsel %vm560, %v553, %v557
  %v562 = vand.u32 2147483647, %v552
  %vm563 = vcmp.eq.f32.partialorder %v562, 8.507059e+37
  %v564 = vand.u32 %v552, 2147483648
  %v565 = vor.u32 1.1754944e-38, %v564
  %v566 = vsel %vm563, %v565, %v561
  %v567 = vmul.f32 1.0, %v566
  %v568 = vtanh.pop %v548
  %v569 = vmul.f32 %v567, %v433
  %571 = vrot.lane.b32.xlu0 %v568, 64
  %v572 = vpop.permute.xlu0 %571
  %v574 = vmul.f32 %v567, %v572
  %576 = vrot.lane.b32.xlu0 %v574, 32
  %v577 = vpop.permute.xlu0 %576
  %v579 = vadd.f32 %v569, %v577
  %v580 = vtanh.pop %v579
  %582 = vrot.lane.b32.xlu0 %v580, 64
  %v583 = vpop.permute.xlu0 %582
  %v585 = vmul.f32 %v567, %v583
  %587 = vrot.lane.b32.xlu0 %v585, 32
  %v588 = vpop.permute.xlu0 %587
  %v589 = vsel %vm176, %v588, 0
  %591 = vmatpush.msra.mxu0 0.0
  %592 = vmatpush.msra.mxu0 0.0
  %593 = vmatpush.msra.mxu0 0.0
  %594 = vmatpush.msra.mxu0 0.0
  %595 = vmatpush.msra.mxu0 0.0
  %596 = vmatpush.msra.mxu0 0.0
  %597 = vmatpush.msra.mxu0 0.0
  %598 = vmatpush.msra.mxu0 0.0
  %599 = vmatpush.msra.mxu0 0.0
  %600 = vmatpush.msra.mxu0 0.0
  %601 = vmatpush.msra.mxu0 0.0
  %602 = vmatpush.msra.mxu0 0.0
  %603 = vmatpush.msra.mxu0 %v45
  %604 = vmatpush.msra.mxu0 %v44
  %605 = vmatpush.msra.mxu0 %v43
  %606 = vmatpush.msra.mxu0 %v42
  %607 = vmatmul.f32.gmra.mxu0 %v589
  %v608 = vpop.f32.mrf.mxu0
  %v609 = vadd.f32 %v171, %v608
  %610 = vdwg.mxu0
  %612 = vrot.lane.b32.xlu0 %v527, 32
  %v613 = vpop.permute.xlu0 %612
  %v614 = vsel %vm176, %v613, 0
  %616 = vmatpush.msra.mxu0 0.0
  %617 = vmatpush.msra.mxu0 0.0
  %618 = vmatpush.msra.mxu0 0.0
  %619 = vmatpush.msra.mxu0 0.0
  %620 = vmatpush.msra.mxu0 0.0
  %621 = vmatpush.msra.mxu0 0.0
  %622 = vmatpush.msra.mxu0 0.0
  %623 = vmatpush.msra.mxu0 0.0
  %624 = vmatpush.msra.mxu0 0.0
  %625 = vmatpush.msra.mxu0 0.0
  %626 = vmatpush.msra.mxu0 0.0
  %627 = vmatpush.msra.mxu0 0.0
  %628 = vmatpush.msra.mxu0 %v53
  %629 = vmatpush.msra.mxu0 %v52
  %630 = vmatpush.msra.mxu0 %v51
  %631 = vmatpush.msra.mxu0 %v50
  %632 = vmatmul.f32.gmra.mxu0 %v614
  %v633 = vpop.f32.mrf.mxu0
  %v634 = vadd.f32 0.0, %v633
  %635 = vdwg.mxu0
  %v636 = vadd.f32 %v609, %v634
  %v637 = vxor.u32 %v636, 2147483648
  %v638 = vmul.f32 %v637, 1.442695
  %v639 = vpow.pop %v638
  %v640 = vadd.f32 %v639, 1.0
  %v641 = vrcp.pop %v640
  %v642 = vmul.f32 %v640, %v641
  %v643 = vsub.f32 1.0, %v642
  %v644 = vmul.f32 %v641, %v643
  %v645 = vadd.f32 %v641, %v644
  %vm646 = vweird.f32 %v640
  %vm647 = vweird.f32 %v641
  %vm648 = vmor %vm646, %vm647
  %v649 = vsel %vm648, %v641, %v645
  %v650 = vand.u32 2147483647, %v640
  %vm651 = vcmp.eq.f32.partialorder %v650, 8.507059e+37
  %v652 = vand.u32 %v640, 2147483648
  %v653 = vor.u32 1.1754944e-38, %v652
  %v654 = vsel %vm651, %v653, %v649
  %v655 = vmul.f32 1.0, %v654
  %v656 = vtanh.pop %v636
  %v657 = vmul.f32 %v655, %v521
  %659 = vrot.lane.b32.xlu0 %v656, 64
  %v660 = vpop.permute.xlu0 %659
  %v662 = vmul.f32 %v655, %v660
  %664 = vrot.lane.b32.xlu0 %v662, 32
  %v665 = vpop.permute.xlu0 %664
  %v667 = vadd.f32 %v657, %v665
  %v668 = vtanh.pop %v667
  %670 = vrot.lane.b32.xlu0 %v668, 64
  %v671 = vpop.permute.xlu0 %670
  %v673 = vmul.f32 %v655, %v671
  %674 = vmatpush.msra.mxu0 0.0
  %675 = vmatpush.msra.mxu0 0.0
  %676 = vmatpush.msra.mxu0 0.0
  %677 = vmatpush.msra.mxu0 0.0
  %678 = vmatpush.msra.mxu0 0.0
  %679 = vmatpush.msra.mxu0 0.0
  %680 = vmatpush.msra.mxu0 0.0
  %681 = vmatpush.msra.mxu0 0.0
  %682 = vmatpush.msra.mxu0 0.0
  %683 = vmatpush.msra.mxu0 0.0
  %684 = vmatpush.msra.mxu0 0.0
  %685 = vmatpush.msra.mxu0 0.0
  %686 = vmatpush.msra.mxu0 %v49
  %687 = vmatpush.msra.mxu0 %v48
  %688 = vmatpush.msra.mxu0 %v47
  %689 = vmatpush.msra.mxu0 %v46
  %690 = vmatmul.f32.gmra.mxu0 %v589
  %v691 = vpop.f32.mrf.mxu0
  %v692 = vadd.f32 0.0, %v691
  %693 = vdwg.mxu0
  %v694 = vadd.f32 %v122, %v692
  %v695 = vxor.u32 %v694, 2147483648
  %v696 = vmul.f32 %v695, 1.442695
  %v697 = vpow.pop %v696
  %v698 = vadd.f32 %v697, 1.0
  %v699 = vrcp.pop %v698
  %v700 = vmul.f32 %v698, %v699
  %v701 = vsub.f32 1.0, %v700
  %v702 = vmul.f32 %v699, %v701
  %v703 = vadd.f32 %v699, %v702
  %vm704 = vweird.f32 %v698
  %vm705 = vweird.f32 %v699
  %vm706 = vmor %vm704, %vm705
  %v707 = vsel %vm706, %v699, %v703
  %v708 = vand.u32 2147483647, %v698
  %vm709 = vcmp.eq.f32.partialorder %v708, 8.507059e+37
  %v710 = vand.u32 %v698, 2147483648
  %v711 = vor.u32 1.1754944e-38, %v710
  %v712 = vsel %vm709, %v711, %v707
  %v713 = vmul.f32 1.0, %v712
  %v714 = vtanh.pop %v694
  %v715 = vmul.f32 %v713, %v579
  %717 = vrot.lane.b32.xlu0 %v714, 64
  %v718 = vpop.permute.xlu0 %717
  %v720 = vmul.f32 %v713, %v718
  %722 = vrot.lane.b32.xlu0 %v720, 32
  %v723 = vpop.permute.xlu0 %722
  %v725 = vadd.f32 %v715, %v723
  %v726 = vtanh.pop %v725
  %728 = vrot.lane.b32.xlu0 %v726, 64
  %v729 = vpop.permute.xlu0 %728
  %v731 = vmul.f32 %v713, %v729
  %733 = vrot.lane.b32.xlu0 %v731, 32
  %v734 = vpop.permute.xlu0 %733
  %v735 = vsel %vm176, %v734, 0
  %737 = vmatpush.msra.mxu0 0.0
  %738 = vmatpush.msra.mxu0 0.0
  %739 = vmatpush.msra.mxu0 0.0
  %740 = vmatpush.msra.mxu0 0.0
  %741 = vmatpush.msra.mxu0 0.0
  %742 = vmatpush.msra.mxu0 0.0
  %743 = vmatpush.msra.mxu0 0.0
  %744 = vmatpush.msra.mxu0 0.0
  %745 = vmatpush.msra.mxu0 0.0
  %746 = vmatpush.msra.mxu0 0.0
  %747 = vmatpush.msra.mxu0 0.0
  %748 = vmatpush.msra.mxu0 0.0
  %749 = vmatpush.msra.mxu0 %v45
  %750 = vmatpush.msra.mxu0 %v44
  %751 = vmatpush.msra.mxu0 %v43
  %752 = vmatpush.msra.mxu0 %v42
  %753 = vmatmul.f32.gmra.mxu0 %v735
  %v754 = vpop.f32.mrf.mxu0
  %v755 = vadd.f32 %v171, %v754
  %756 = vdwg.mxu0
  %758 = vrot.lane.b32.xlu0 %v673, 32
  %v759 = vpop.permute.xlu0 %758
  %v760 = vsel %vm176, %v759, 0
  %762 = vmatpush.msra.mxu0 0.0
  %763 = vmatpush.msra.mxu0 0.0
  %764 = vmatpush.msra.mxu0 0.0
  %765 = vmatpush.msra.mxu0 0.0
  %766 = vmatpush.msra.mxu0 0.0
  %767 = vmatpush.msra.mxu0 0.0
  %768 = vmatpush.msra.mxu0 0.0
  %769 = vmatpush.msra.mxu0 0.0
  %770 = vmatpush.msra.mxu0 0.0
  %771 = vmatpush.msra.mxu0 0.0
  %772 = vmatpush.msra.mxu0 0.0
  %773 = vmatpush.msra.mxu0 0.0
  %774 = vmatpush.msra.mxu0 %v53
  %775 = vmatpush.msra.mxu0 %v52
  %776 = vmatpush.msra.mxu0 %v51
  %777 = vmatpush.msra.mxu0 %v50
  %778 = vmatmul.f32.gmra.mxu0 %v760
  %v779 = vpop.f32.mrf.mxu0
  %v780 = vadd.f32 0.0, %v779
  %781 = vdwg.mxu0
  %v782 = vadd.f32 %v755, %v780
  %v783 = vxor.u32 %v782, 2147483648
  %v784 = vmul.f32 %v783, 1.442695
  %v785 = vpow.pop %v784
  %v786 = vadd.f32 %v785, 1.0
  %v787 = vrcp.pop %v786
  %v788 = vmul.f32 %v786, %v787
  %v789 = vsub.f32 1.0, %v788
  %v790 = vmul.f32 %v787, %v789
  %v791 = vadd.f32 %v787, %v790
  %vm792 = vweird.f32 %v786
  %vm793 = vweird.f32 %v787
  %vm794 = vmor %vm792, %vm793
  %v795 = vsel %vm794, %v787, %v791
  %v796 = vand.u32 2147483647, %v786
  %vm797 = vcmp.eq.f32.partialorder %v796, 8.507059e+37
  %v798 = vand.u32 %v786, 2147483648
  %v799 = vor.u32 1.1754944e-38, %v798
  %v800 = vsel %vm797, %v799, %v795
  %v801 = vmul.f32 1.0, %v800
  %v802 = vtanh.pop %v782
  %v803 = vmul.f32 %v801, %v667
  %805 = vrot.lane.b32.xlu0 %v802, 64
  %v806 = vpop.permute.xlu0 %805
  %v808 = vmul.f32 %v801, %v806
  %810 = vrot.lane.b32.xlu0 %v808, 32
  %v811 = vpop.permute.xlu0 %810
  %v813 = vadd.f32 %v803, %v811
  %v814 = vtanh.pop %v813
  %816 = vrot.lane.b32.xlu0 %v814, 64
  %v817 = vpop.permute.xlu0 %816
  %v819 = vmul.f32 %v801, %v817
  %820 = vmatpush.msra.mxu0 0.0
  %821 = vmatpush.msra.mxu0 0.0
  %822 = vmatpush.msra.mxu0 0.0
  %823 = vmatpush.msra.mxu0 0.0
  %824 = vmatpush.msra.mxu0 0.0
  %825 = vmatpush.msra.mxu0 0.0
  %826 = vmatpush.msra.mxu0 0.0
  %827 = vmatpush.msra.mxu0 0.0
  %828 = vmatpush.msra.mxu0 0.0
  %829 = vmatpush.msra.mxu0 0.0
  %830 = vmatpush.msra.mxu0 0.0
  %831 = vmatpush.msra.mxu0 0.0
  %832 = vmatpush.msra.mxu0 %v49
  %833 = vmatpush.msra.mxu0 %v48
  %834 = vmatpush.msra.mxu0 %v47
  %835 = vmatpush.msra.mxu0 %v46
  %836 = vmatmul.f32.gmra.mxu0 %v735
  %v837 = vpop.f32.mrf.mxu0
  %v838 = vadd.f32 0.0, %v837
  %839 = vdwg.mxu0
  %v840 = vadd.f32 %v125, %v838
  %v841 = vxor.u32 %v840, 2147483648
  %v842 = vmul.f32 %v841, 1.442695
  %v843 = vpow.pop %v842
  %v844 = vadd.f32 %v843, 1.0
  %v845 = vrcp.pop %v844
  %v846 = vmul.f32 %v844, %v845
  %v847 = vsub.f32 1.0, %v846
  %v848 = vmul.f32 %v845, %v847
  %v849 = vadd.f32 %v845, %v848
  %vm850 = vweird.f32 %v844
  %vm851 = vweird.f32 %v845
  %vm852 = vmor %vm850, %vm851
  %v853 = vsel %vm852, %v845, %v849
  %v854 = vand.u32 2147483647, %v844
  %vm855 = vcmp.eq.f32.partialorder %v854, 8.507059e+37
  %v856 = vand.u32 %v844, 2147483648
  %v857 = vor.u32 1.1754944e-38, %v856
  %v858 = vsel %vm855, %v857, %v853
  %v859 = vmul.f32 1.0, %v858
  %v860 = vtanh.pop %v840
  %v861 = vmul.f32 %v859, %v725
  %863 = vrot.lane.b32.xlu0 %v860, 64
  %v864 = vpop.permute.xlu0 %863
  %v866 = vmul.f32 %v859, %v864
  %868 = vrot.lane.b32.xlu0 %v866, 32
  %v869 = vpop.permute.xlu0 %868
  %v871 = vadd.f32 %v861, %v869
  %v872 = vtanh.pop %v871
  %874 = vrot.lane.b32.xlu0 %v872, 64
  %v875 = vpop.permute.xlu0 %874
  %v877 = vmul.f32 %v859, %v875
  %879 = vrot.lane.b32.xlu0 %v877, 32
  %v880 = vpop.permute.xlu0 %879
  %v881 = vsel %vm176, %v880, 0
  %883 = vmatpush.msra.mxu0 0.0
  %884 = vmatpush.msra.mxu0 0.0
  %885 = vmatpush.msra.mxu0 0.0
  %886 = vmatpush.msra.mxu0 0.0
  %887 = vmatpush.msra.mxu0 0.0
  %888 = vmatpush.msra.mxu0 0.0
  %889 = vmatpush.msra.mxu0 0.0
  %890 = vmatpush.msra.mxu0 0.0
  %891 = vmatpush.msra.mxu0 0.0
  %892 = vmatpush.msra.mxu0 0.0
  %893 = vmatpush.msra.mxu0 0.0
  %894 = vmatpush.msra.mxu0 0.0
  %895 = vmatpush.msra.mxu0 %v45
  %896 = vmatpush.msra.mxu0 %v44
  %897 = vmatpush.msra.mxu0 %v43
  %898 = vmatpush.msra.mxu0 %v42
  %899 = vmatmul.f32.gmra.mxu0 %v881
  %v900 = vpop.f32.mrf.mxu0
  %v901 = vadd.f32 %v171, %v900
  %902 = vdwg.mxu0
  %904 = vrot.lane.b32.xlu0 %v819, 32
  %v905 = vpop.permute.xlu0 %904
  %v906 = vsel %vm176, %v905, 0
  %908 = vmatpush.msra.mxu0 0.0
  %909 = vmatpush.msra.mxu0 0.0
  %910 = vmatpush.msra.mxu0 0.0
  %911 = vmatpush.msra.mxu0 0.0
  %912 = vmatpush.msra.mxu0 0.0
  %913 = vmatpush.msra.mxu0 0.0
  %914 = vmatpush.msra.mxu0 0.0
  %915 = vmatpush.msra.mxu0 0.0
  %916 = vmatpush.msra.mxu0 0.0
  %917 = vmatpush.msra.mxu0 0.0
  %918 = vmatpush.msra.mxu0 0.0
  %919 = vmatpush.msra.mxu0 0.0
  %920 = vmatpush.msra.mxu0 %v53
  %921 = vmatpush.msra.mxu0 %v52
  %922 = vmatpush.msra.mxu0 %v51
  %923 = vmatpush.msra.mxu0 %v50
  %924 = vmatmul.f32.gmra.mxu0 %v906
  %v925 = vpop.f32.mrf.mxu0
  %v926 = vadd.f32 0.0, %v925
  %927 = vdwg.mxu0
  %v928 = vadd.f32 %v901, %v926
  %v929 = vxor.u32 %v928, 2147483648
  %v930 = vmul.f32 %v929, 1.442695
  %v931 = vpow.pop %v930
  %v932 = vadd.f32 %v931, 1.0
  %v933 = vrcp.pop %v932
  %v934 = vmul.f32 %v932, %v933
  %v935 = vsub.f32 1.0, %v934
  %v936 = vmul.f32 %v933, %v935
  %v937 = vadd.f32 %v933, %v936
  %vm938 = vweird.f32 %v932
  %vm939 = vweird.f32 %v933
  %vm940 = vmor %vm938, %vm939
  %v941 = vsel %vm940, %v933, %v937
  %v942 = vand.u32 2147483647, %v932
  %vm943 = vcmp.eq.f32.partialorder %v942, 8.507059e+37
  %v944 = vand.u32 %v932, 2147483648
  %v945 = vor.u32 1.1754944e-38, %v944
  %v946 = vsel %vm943, %v945, %v941
  %v947 = vmul.f32 1.0, %v946
  %v948 = vtanh.pop %v928
  %v949 = vmul.f32 %v947, %v813
  %951 = vrot.lane.b32.xlu0 %v948, 64
  %v952 = vpop.permute.xlu0 %951
  %v954 = vmul.f32 %v947, %v952
  %956 = vrot.lane.b32.xlu0 %v954, 32
  %v957 = vpop.permute.xlu0 %956
  %v959 = vadd.f32 %v949, %v957
  %v960 = vtanh.pop %v959
  %962 = vrot.lane.b32.xlu0 %v960, 64
  %v963 = vpop.permute.xlu0 %962
  %v965 = vmul.f32 %v947, %v963
  %966 = vmatpush.msra.mxu0 0.0
  %967 = vmatpush.msra.mxu0 0.0
  %968 = vmatpush.msra.mxu0 0.0
  %969 = vmatpush.msra.mxu0 0.0
  %970 = vmatpush.msra.mxu0 0.0
  %971 = vmatpush.msra.mxu0 0.0
  %972 = vmatpush.msra.mxu0 0.0
  %973 = vmatpush.msra.mxu0 0.0
  %974 = vmatpush.msra.mxu0 0.0
  %975 = vmatpush.msra.mxu0 0.0
  %976 = vmatpush.msra.mxu0 0.0
  %977 = vmatpush.msra.mxu0 0.0
  %978 = vmatpush.msra.mxu0 %v49
  %979 = vmatpush.msra.mxu0 %v48
  %980 = vmatpush.msra.mxu0 %v47
  %981 = vmatpush.msra.mxu0 %v46
  %982 = vmatmul.f32.gmra.mxu0 %v881
  %v983 = vpop.f32.mrf.mxu0
  %v984 = vadd.f32 0.0, %v983
  %985 = vdwg.mxu0
  %v986 = vadd.f32 %v128, %v984
  %v987 = vxor.u32 %v986, 2147483648
  %v988 = vmul.f32 %v987, 1.442695
  %v989 = vpow.pop %v988
  %v990 = vadd.f32 %v989, 1.0
  %v991 = vrcp.pop %v990
  %v992 = vmul.f32 %v990, %v991
  %v993 = vsub.f32 1.0, %v992
  %v994 = vmul.f32 %v991, %v993
  %v995 = vadd.f32 %v991, %v994
  %vm996 = vweird.f32 %v990
  %vm997 = vweird.f32 %v991
  %vm998 = vmor %vm996, %vm997
  %v999 = vsel %vm998, %v991, %v995
  %v1000 = vand.u32 2147483647, %v990
  %vm1001 = vcmp.eq.f32.partialorder %v1000, 8.507059e+37
  %v1002 = vand.u32 %v990, 2147483648
  %v1003 = vor.u32 1.1754944e-38, %v1002
  %v1004 = vsel %vm1001, %v1003, %v999
  %v1005 = vmul.f32 1.0, %v1004
  %v1006 = vtanh.pop %v986
  %v1007 = vmul.f32 %v1005, %v871
  %1009 = vrot.lane.b32.xlu0 %v1006, 64
  %v1010 = vpop.permute.xlu0 %1009
  %v1012 = vmul.f32 %v1005, %v1010
  %1014 = vrot.lane.b32.xlu0 %v1012, 32
  %v1015 = vpop.permute.xlu0 %1014
  %v1017 = vadd.f32 %v1007, %v1015
  %v1018 = vtanh.pop %v1017
  %1020 = vrot.lane.b32.xlu0 %v1018, 64
  %v1021 = vpop.permute.xlu0 %1020
  %v1023 = vmul.f32 %v1005, %v1021
  %1025 = vrot.lane.b32.xlu0 %v1023, 32
  %v1026 = vpop.permute.xlu0 %1025
  %v1027 = vsel %vm176, %v1026, 0
  %1029 = vmatpush.msra.mxu0 0.0
  %1030 = vmatpush.msra.mxu0 0.0
  %1031 = vmatpush.msra.mxu0 0.0
  %1032 = vmatpush.msra.mxu0 0.0
  %1033 = vmatpush.msra.mxu0 0.0
  %1034 = vmatpush.msra.mxu0 0.0
  %1035 = vmatpush.msra.mxu0 0.0
  %1036 = vmatpush.msra.mxu0 0.0
  %1037 = vmatpush.msra.mxu0 0.0
  %1038 = vmatpush.msra.mxu0 0.0
  %1039 = vmatpush.msra.mxu0 0.0
  %1040 = vmatpush.msra.mxu0 0.0
  %1041 = vmatpush.msra.mxu0 %v45
  %1042 = vmatpush.msra.mxu0 %v44
  %1043 = vmatpush.msra.mxu0 %v43
  %1044 = vmatpush.msra.mxu0 %v42
  %1045 = vmatmul.f32.gmra.mxu0 %v1027
  %v1046 = vpop.f32.mrf.mxu0
  %v1047 = vadd.f32 %v171, %v1046
  %1048 = vdwg.mxu0
  %1050 = vrot.lane.b32.xlu0 %v965, 32
  %v1051 = vpop.permute.xlu0 %1050
  %v1052 = vsel %vm176, %v1051, 0
  %1054 = vmatpush.msra.mxu0 0.0
  %1055 = vmatpush.msra.mxu0 0.0
  %1056 = vmatpush.msra.mxu0 0.0
  %1057 = vmatpush.msra.mxu0 0.0
  %1058 = vmatpush.msra.mxu0 0.0
  %1059 = vmatpush.msra.mxu0 0.0
  %1060 = vmatpush.msra.mxu0 0.0
  %1061 = vmatpush.msra.mxu0 0.0
  %1062 = vmatpush.msra.mxu0 0.0
  %1063 = vmatpush.msra.mxu0 0.0
  %1064 = vmatpush.msra.mxu0 0.0
  %1065 = vmatpush.msra.mxu0 0.0
  %1066 = vmatpush.msra.mxu0 %v53
  %1067 = vmatpush.msra.mxu0 %v52
  %1068 = vmatpush.msra.mxu0 %v51
  %1069 = vmatpush.msra.mxu0 %v50
  %1070 = vmatmul.f32.gmra.mxu0 %v1052
  %v1071 = vpop.f32.mrf.mxu0
  %v1072 = vadd.f32 0.0, %v1071
  %1073 = vdwg.mxu0
  %v1074 = vadd.f32 %v1047, %v1072
  %v1075 = vxor.u32 %v1074, 2147483648
  %v1076 = vmul.f32 %v1075, 1.442695
  %v1077 = vpow.pop %v1076
  %v1078 = vadd.f32 %v1077, 1.0
  %v1079 = vrcp.pop %v1078
  %v1080 = vmul.f32 %v1078, %v1079
  %v1081 = vsub.f32 1.0, %v1080
  %v1082 = vmul.f32 %v1079, %v1081
  %v1083 = vadd.f32 %v1079, %v1082
  %vm1084 = vweird.f32 %v1078
  %vm1085 = vweird.f32 %v1079
  %vm1086 = vmor %vm1084, %vm1085
  %v1087 = vsel %vm1086, %v1079, %v1083
  %v1088 = vand.u32 2147483647, %v1078
  %vm1089 = vcmp.eq.f32.partialorder %v1088, 8.507059e+37
  %v1090 = vand.u32 %v1078, 2147483648
  %v1091 = vor.u32 1.1754944e-38, %v1090
  %v1092 = vsel %vm1089, %v1091, %v1087
  %v1093 = vmul.f32 1.0, %v1092
  %v1094 = vtanh.pop %v1074
  %v1095 = vmul.f32 %v1093, %v959
  %1097 = vrot.lane.b32.xlu0 %v1094, 64
  %v1098 = vpop.permute.xlu0 %1097
  %v1100 = vmul.f32 %v1093, %v1098
  %1102 = vrot.lane.b32.xlu0 %v1100, 32
  %v1103 = vpop.permute.xlu0 %1102
  %v1105 = vadd.f32 %v1095, %v1103
  %v1106 = vtanh.pop %v1105
  %1108 = vrot.lane.b32.xlu0 %v1106, 64
  %v1109 = vpop.permute.xlu0 %1108
  %v1111 = vmul.f32 %v1093, %v1109
  %1112 = vmatpush.msra.mxu0 0.0
  %1113 = vmatpush.msra.mxu0 0.0
  %1114 = vmatpush.msra.mxu0 0.0
  %1115 = vmatpush.msra.mxu0 0.0
  %1116 = vmatpush.msra.mxu0 0.0
  %1117 = vmatpush.msra.mxu0 0.0
  %1118 = vmatpush.msra.mxu0 0.0
  %1119 = vmatpush.msra.mxu0 0.0
  %1120 = vmatpush.msra.mxu0 0.0
  %1121 = vmatpush.msra.mxu0 0.0
  %1122 = vmatpush.msra.mxu0 0.0
  %1123 = vmatpush.msra.mxu0 0.0
  %1124 = vmatpush.msra.mxu0 %v49
  %1125 = vmatpush.msra.mxu0 %v48
  %1126 = vmatpush.msra.mxu0 %v47
  %1127 = vmatpush.msra.mxu0 %v46
  %1128 = vmatmul.f32.gmra.mxu0 %v1027
  %v1129 = vpop.f32.mrf.mxu0
  %v1130 = vadd.f32 0.0, %v1129
  %1131 = vdwg.mxu0
  %v1132 = vadd.f32 %v131, %v1130
  %v1133 = vxor.u32 %v1132, 2147483648
  %v1134 = vmul.f32 %v1133, 1.442695
  %v1135 = vpow.pop %v1134
  %v1136 = vadd.f32 %v1135, 1.0
  %v1137 = vrcp.pop %v1136
  %v1138 = vmul.f32 %v1136, %v1137
  %v1139 = vsub.f32 1.0, %v1138
  %v1140 = vmul.f32 %v1137, %v1139
  %v1141 = vadd.f32 %v1137, %v1140
  %vm1142 = vweird.f32 %v1136
  %vm1143 = vweird.f32 %v1137
  %vm1144 = vmor %vm1142, %vm1143
  %v1145 = vsel %vm1144, %v1137, %v1141
  %v1146 = vand.u32 2147483647, %v1136
  %vm1147 = vcmp.eq.f32.partialorder %v1146, 8.507059e+37
  %v1148 = vand.u32 %v1136, 2147483648
  %v1149 = vor.u32 1.1754944e-38, %v1148
  %v1150 = vsel %vm1147, %v1149, %v1145
  %v1151 = vmul.f32 1.0, %v1150
  %v1152 = vtanh.pop %v1132
  %v1153 = vmul.f32 %v1151, %v1017
  %1155 = vrot.lane.b32.xlu0 %v1152, 64
  %v1156 = vpop.permute.xlu0 %1155
  %v1158 = vmul.f32 %v1151, %v1156
  %1160 = vrot.lane.b32.xlu0 %v1158, 32
  %v1161 = vpop.permute.xlu0 %1160
  %v1163 = vadd.f32 %v1153, %v1161
  %v1164 = vtanh.pop %v1163
  %1166 = vrot.lane.b32.xlu0 %v1164, 64
  %v1167 = vpop.permute.xlu0 %1166
  %v1169 = vmul.f32 %v1151, %v1167
  %1171 = vrot.lane.b32.xlu0 %v1169, 32
  %v1172 = vpop.permute.xlu0 %1171
  %v1173 = vsel %vm176, %v1172, 0
  %1175 = vmatpush.msra.mxu0 0.0
  %1176 = vmatpush.msra.mxu0 0.0
  %1177 = vmatpush.msra.mxu0 0.0
  %1178 = vmatpush.msra.mxu0 0.0
  %1179 = vmatpush.msra.mxu0 0.0
  %1180 = vmatpush.msra.mxu0 0.0
  %1181 = vmatpush.msra.mxu0 0.0
  %1182 = vmatpush.msra.mxu0 0.0
  %1183 = vmatpush.msra.mxu0 0.0
  %1184 = vmatpush.msra.mxu0 0.0
  %1185 = vmatpush.msra.mxu0 0.0
  %1186 = vmatpush.msra.mxu0 0.0
  %1187 = vmatpush.msra.mxu0 %v45
  %1188 = vmatpush.msra.mxu0 %v44
  %1189 = vmatpush.msra.mxu0 %v43
  %1190 = vmatpush.msra.mxu0 %v42
  %1191 = vmatmul.f32.gmra.mxu0 %v1173
  %v1192 = vpop.f32.mrf.mxu0
  %v1193 = vadd.f32 %v171, %v1192
  %1194 = vdwg.mxu0
  %1196 = vrot.lane.b32.xlu0 %v1111, 32
  %v1197 = vpop.permute.xlu0 %1196
  %v1198 = vsel %vm176, %v1197, 0
  %1200 = vmatpush.msra.mxu0 0.0
  %1201 = vmatpush.msra.mxu0 0.0
  %1202 = vmatpush.msra.mxu0 0.0
  %1203 = vmatpush.msra.mxu0 0.0
  %1204 = vmatpush.msra.mxu0 0.0
  %1205 = vmatpush.msra.mxu0 0.0
  %1206 = vmatpush.msra.mxu0 0.0
  %1207 = vmatpush.msra.mxu0 0.0
  %1208 = vmatpush.msra.mxu0 0.0
  %1209 = vmatpush.msra.mxu0 0.0
  %1210 = vmatpush.msra.mxu0 0.0
  %1211 = vmatpush.msra.mxu0 0.0
  %1212 = vmatpush.msra.mxu0 %v53
  %1213 = vmatpush.msra.mxu0 %v52
  %1214 = vmatpush.msra.mxu0 %v51
  %1215 = vmatpush.msra.mxu0 %v50
  %1216 = vmatmul.f32.gmra.mxu0 %v1198
  %v1217 = vpop.f32.mrf.mxu0
  %v1218 = vadd.f32 0.0, %v1217
  %1219 = vdwg.mxu0
  %v1220 = vadd.f32 %v1193, %v1218
  %v1221 = vxor.u32 %v1220, 2147483648
  %v1222 = vmul.f32 %v1221, 1.442695
  %v1223 = vpow.pop %v1222
  %v1224 = vadd.f32 %v1223, 1.0
  %v1225 = vrcp.pop %v1224
  %v1226 = vmul.f32 %v1224, %v1225
  %v1227 = vsub.f32 1.0, %v1226
  %v1228 = vmul.f32 %v1225, %v1227
  %v1229 = vadd.f32 %v1225, %v1228
  %vm1230 = vweird.f32 %v1224
  %vm1231 = vweird.f32 %v1225
  %vm1232 = vmor %vm1230, %vm1231
  %v1233 = vsel %vm1232, %v1225, %v1229
  %v1234 = vand.u32 2147483647, %v1224
  %vm1235 = vcmp.eq.f32.partialorder %v1234, 8.507059e+37
  %v1236 = vand.u32 %v1224, 2147483648
  %v1237 = vor.u32 1.1754944e-38, %v1236
  %v1238 = vsel %vm1235, %v1237, %v1233
  %v1239 = vmul.f32 1.0, %v1238
  %v1240 = vtanh.pop %v1220
  %v1241 = vmul.f32 %v1239, %v1105
  %1243 = vrot.lane.b32.xlu0 %v1240, 64
  %v1244 = vpop.permute.xlu0 %1243
  %v1246 = vmul.f32 %v1239, %v1244
  %1248 = vrot.lane.b32.xlu0 %v1246, 32
  %v1249 = vpop.permute.xlu0 %1248
  %v1251 = vadd.f32 %v1241, %v1249
  %v1252 = vtanh.pop %v1251
  %1254 = vrot.lane.b32.xlu0 %v1252, 64
  %v1255 = vpop.permute.xlu0 %1254
  %v1257 = vmul.f32 %v1239, %v1255
  %v1258 = vld [vmem:[%s7] sm:$0xff]
  %v1259 = vld [vmem:[%s7 + $0x8] sm:$0xff]
  %v1260 = vld [vmem:[%s7 + $0x10] sm:$0xff]
  %v1261 = vld [vmem:[%s7 + $0x18] sm:$0xff]
  %v1262 = vld [vmem:[%s8] sm:$0x1]
  %v1264 = vperm.slane %v1262, 0
  %1267 = vrot.lane.b32.xlu0 %v1257, 32
  %v1268 = vpop.permute.xlu0 %1267
  %v1269 = vsel %vm176, %v1268, 0
  %1271 = vmatpush.msra.mxu0 0.0
  %1272 = vmatpush.msra.mxu0 0.0
  %1273 = vmatpush.msra.mxu0 0.0
  %1274 = vmatpush.msra.mxu0 0.0
  %1275 = vmatpush.msra.mxu0 0.0
  %1276 = vmatpush.msra.mxu0 0.0
  %1277 = vmatpush.msra.mxu0 0.0
  %1278 = vmatpush.msra.mxu0 0.0
  %1279 = vmatpush.msra.mxu0 0.0
  %1280 = vmatpush.msra.mxu0 0.0
  %1281 = vmatpush.msra.mxu0 0.0
  %1282 = vmatpush.msra.mxu0 0.0
  %1283 = vmatpush.msra.mxu0 %v1261
  %1284 = vmatpush.msra.mxu0 %v1260
  %1285 = vmatpush.msra.mxu0 %v1259
  %1286 = vmatpush.msra.mxu0 %v1258
  %1287 = vmatmul.f32.gmra.mxu0 %v1269
  %v1288 = vpop.f32.mrf.mxu0
  %v1289 = vadd.f32 %v1264, %v1288
  %1290 = vdwg.mxu0
  %v1291 = vmax.f32 %v1289, 0.0
  %v1292 = vld [vmem:[%s9] sm:$0xff]
  %v1293 = vld [vmem:[%s9 + $0x8] sm:$0xff]
  %v1294 = vld [vmem:[#allocation2] sm:$0x1]
  %v1296 = vperm.slane %v1294, 0
  %v1299 = vsel %vm67, %v1291, 0
  %1301 = vmatpush.msra.mxu0 0.0
  %1302 = vmatpush.msra.mxu0 0.0
  %1303 = vmatpush.msra.mxu0 0.0
  %1304 = vmatpush.msra.mxu0 0.0
  %1305 = vmatpush.msra.mxu0 0.0
  %1306 = vmatpush.msra.mxu0 0.0
  %1307 = vmatpush.msra.mxu0 0.0
  %1308 = vmatpush.msra.mxu0 0.0
  %1309 = vmatpush.msra.mxu0 0.0
  %1310 = vmatpush.msra.mxu0 0.0
  %1311 = vmatpush.msra.mxu0 0.0
  %1312 = vmatpush.msra.mxu0 0.0
  %1313 = vmatpush.msra.mxu0 0.0
  %1314 = vmatpush.msra.mxu0 0.0
  %1315 = vmatpush.msra.mxu0 %v1293
  %1316 = vmatpush.msra.mxu0 %v1292
  %1317 = vmatmul.f32.gmra.mxu0 %v1299
  %v1318 = vpop.f32.mrf.mxu0
  %v1319 = vadd.f32 %v1296, %v1318
  %1320 = vdwg.mxu0
  %vm1321 = vcmask 7168
  %1322 = vst.msk [vmem:[%s11] sm:$0xff] %vm1321, %v1319
  // Predicated region
  $region46: #{_lambda_.1} parent=0 // pred_check
    _
  $region47: #{_lambda_.1} parent=0 // pred_check_branch
    %1324 = sbr.rel (0) target = $region49
  $region48: #{_lambda_.1} parent=0 // pred_region
    _
  $region49: #{_lambda_.1} parent=0 // pred_fallthru
    _
  // Predicated region
  $region50: #{_lambda_.1} parent=0 // pred_check
    _
  $region51: #{_lambda_.1} parent=0 // pred_check_branch
    %1326 = sbr.rel (0) target = $region53
  $region52: #{_lambda_.1} parent=0 // pred_region
    _
  $region53: #{_lambda_.1} parent=0 // pred_fallthru
    _

</llo_original>
